<compile_context>
chip_gen: v7x
topology: tpu7x:2x2x1
jax: 0.10.0
libtpu: 0.0.40
codegen_flags: <defaults>
</compile_context>

<pallas_src>
import functools
import math

import jax
import jax.numpy as jnp
import numpy as np
from jax.experimental import pallas as pl
from jax.experimental.pallas import tpu as pltpu

WINDOW_SIZE = 11
SIGMA = 1.5
_C1 = 0.01 ** 2   # (0.01 * peak)^2, peak = 1.0
_C2 = 0.03 ** 2   # (0.03 * peak)^2


def _gaussian_1d_np(window_size: int = WINDOW_SIZE,
                    sigma: float = SIGMA) -> np.ndarray:
    g = np.array(
        [math.exp(-((x - window_size // 2) ** 2) / float(2 * sigma ** 2))
         for x in range(window_size)],
        dtype=np.float32,
    )
    return (g / g.sum()).astype(np.float32)


def _create_ssim_window_np(window_size: int = WINDOW_SIZE,
                           sigma: float = SIGMA) -> np.ndarray:
    g = _gaussian_1d_np(window_size, sigma)
    return np.outer(g, g).astype(np.float32)  # (ws, ws), matches reference


def _round_up(x: int, m: int) -> int:
    return ((x + m - 1) // m) * m


def _ssim_kernel(gh_ref, gvbd_ref, img1_ref, img2_ref, out_ref, *, c1, c2):
    """One grid step: PB row-stacked planes -> per-row partial SSIM sums."""
    gh = gh_ref[...]      # (W, Wo)          horizontal 11-tap band matrix
    gvbd = gvbd_ref[...]  # (PB*Ho, PB*Hp)   block-diagonal vertical band matrix

    # Cast AFTER the VMEM load (free on VPU; keeps HBM traffic in input dtype).
    x1 = img1_ref[...].astype(jnp.float32)   # (PB*Hp, W) planes stacked on rows
    x2 = img2_ref[...].astype(jnp.float32)

    def blur(p):
        # Separable "valid" Gaussian blur of ALL PB planes with two MXU
        # matmuls (horizontal first -> smaller second operand).
        t = jnp.dot(p, gh, preferred_element_type=jnp.float32)       # (PB*Hp, Wo)
        return jnp.dot(gvbd, t, preferred_element_type=jnp.float32)  # (PB*Ho, Wo)

    # Hoisted product planes: 5 blurs (10 matmuls) per grid step in total.
    mu1 = blur(x1)
    mu2 = blur(x2)
    e11 = blur(x1 * x1)
    e22 = blur(x2 * x2)
    e12 = blur(x1 * x2)

    mu1_sq = mu1 * mu1
    mu2_sq = mu2 * mu2
    mu1_mu2 = mu1 * mu2
    sigma1_sq = e11 - mu1_sq
    sigma2_sq = e22 - mu2_sq
    sigma12 = e12 - mu1_mu2

    ssim_map = ((2.0 * mu1_mu2 + c1) * (2.0 * sigma12 + c2)) / (
        (mu1_sq + mu2_sq + c1) * (sigma1_sq + sigma2_sq + c2))

    # Lane (axis=1) partial reduction only; per-plane slicing, cross-plane sum
    # and the final mean live in the wrapper.  Disjoint tile -> parallel-safe.
    out_ref[...] = jnp.sum(ssim_map, axis=1, keepdims=True)[None]   # (1,PB*Ho,1)


def ssim_pallas(img1: jax.Array, img2: jax.Array) -> jax.Array:
    """SSIM(img1, img2), NCHW, peak=1.0, size_average=True (scalar mean)."""
    assert img1.shape == img2.shape, "Image shapes are different."
    N, C, H, W = img1.shape
    ws = WINDOW_SIZE
    Ho = H - ws + 1
    Wo = W - ws + 1
    assert Ho > 0 and Wo > 0, "spatial dims must be >= 11"

    P = N * C
    Hp = _round_up(H, 8)                   # sublane-pad each plane's rows
    PB = max(1, min(512 // Hp, P))         # planes stacked per grid step
    P_pad = _round_up(P, PB)
    steps = P_pad // PB

    # 1-D Gaussian taps -> banded matrices so the separable "valid" blur runs
    # on the MXU:  blurred_k = Gv @ plane_k @ Gh   (window == outer(g, g)).
    g = _gaussian_1d_np()
    gh_np = np.zeros((W, Wo), np.float32)
    for o in range(Wo):
        gh_np[o:o + ws, o] = g
    gv_np = np.zeros((Ho, Hp), np.float32)
    for o in range(Ho):
        gv_np[o, o:o + ws] = g
    # Block-diagonal vertical band: all PB stacked planes blur in ONE matmul.
    gvbd_np = np.zeros((PB * Ho, PB * Hp), np.float32)
    for k in range(PB):
        gvbd_np[k * Ho:(k + 1) * Ho, k * Hp:(k + 1) * Hp] = gv_np
    gh = jnp.asarray(gh_np)
    gvbd = jnp.asarray(gvbd_np)

    # (N,C,H,W) -> (P,H,W) -> zero-pad planes/rows -> row-stack: (P_pad*Hp, W).
    # When no padding is needed (common case) this is a free reshape.
    x1 = img1.reshape(P, H, W)
    x2 = img2.reshape(P, H, W)
    if P_pad != P or Hp != H:
        pad = ((0, P_pad - P), (0, Hp - H), (0, 0))
        x1 = jnp.pad(x1, pad)
        x2 = jnp.pad(x2, pad)
    x1 = x1.reshape(P_pad * Hp, W)
    x2 = x2.reshape(P_pad * Hp, W)

    # TODO(synk): for very large H/W, add spatial (halo) tiling so the per-step
    # input blocks + f32 intermediates stay under scoped VMEM (v5e/v7x).
    kernel = functools.partial(_ssim_kernel, c1=float(_C1), c2=float(_C2))

    partial = pl.pallas_call(
        kernel,
        out_shape=jax.ShapeDtypeStruct((steps, PB * Ho, 1), jnp.float32),
        grid=(steps,),
        in_specs=[
            # Band matrices: full-array blocks, constant index -> resident.
            pl.BlockSpec((W, Wo), lambda i: (0, 0)),
            pl.BlockSpec((PB * Ho, PB * Hp), lambda i: (0, 0)),
            pl.BlockSpec((PB * Hp, W), lambda i: (i, 0)),
            pl.BlockSpec((PB * Hp, W), lambda i: (i, 0)),
        ],
        # Each grid step writes a disjoint tile -> safe for "parallel".
        out_specs=pl.BlockSpec((1, PB * Ho, 1), lambda i: (i, 0, 0)),
        compiler_params=pltpu.CompilerParams(
            dimension_semantics=("parallel",)),
    )(gh, gvbd, x1, x2)

    # (steps, PB*Ho, 1) -> per-plane row sums; drop padded planes; global mean.
    per_plane = partial.reshape(P_pad, Ho)
    return jnp.sum(per_plane[:P]) / jnp.float32(P * Ho * Wo)


def _ssim_reference(img1: jax.Array, img2: jax.Array) -> jax.Array:
    """Pure-JAX reference (depthwise conv with the 2-D window)."""
    img1 = img1.astype(jnp.float32)
    img2 = img2.astype(jnp.float32)
    N, C, H, W = img1.shape
    win = jnp.asarray(_create_ssim_window_np())[None, None]        # (1,1,ws,ws)
    win = jnp.tile(win, (C, 1, 1, 1))                               # (C,1,ws,ws)

    def dwconv(x):
        return jax.lax.conv_general_dilated(
            x, win, window_strides=(1, 1), padding="VALID",
            dimension_numbers=("NCHW", "OIHW", "NCHW"),
            feature_group_count=C)

    c1 = 0.01 ** 2
    c2 = 0.03 ** 2
    mu1 = dwconv(img1)
    mu2 = dwconv(img2)
    mu1_sq, mu2_sq, mu1_mu2 = mu1 * mu1, mu2 * mu2, mu1 * mu2
    sigma1_sq = dwconv(img1 * img1) - mu1_sq
    sigma2_sq = dwconv(img2 * img2) - mu2_sq
    sigma12 = dwconv(img1 * img2) - mu1_mu2
    ssim_map = ((2 * mu1_mu2 + c1) * (2 * sigma12 + c2)) / (
        (mu1_sq + mu2_sq + c1) * (sigma1_sq + sigma2_sq + c2))
    return ssim_map.mean()


if __name__ == "__main__":
    key = jax.random.PRNGKey(0)
    k1, k2 = jax.random.split(key)
    N, C, H, W = 2, 4, 16, 16
    img1 = jax.random.uniform(k1, (N, C, H, W), dtype=jnp.float32)
    img2 = jax.random.uniform(k2, (N, C, H, W), dtype=jnp.float32)

    out = ssim_pallas(img1, img2)
    jax.block_until_ready(out)

    ref = _ssim_reference(img1, img2)
    jax.block_until_ready(ref)

    assert out.shape == (), f"expected scalar, got {out.shape}"
    assert jnp.allclose(out, ref, rtol=1e-4, atol=1e-5), (out, ref)
    print("KERNEL_OK")
</pallas_src>

<mosaic_0001>
module attributes {stable_mosaic.version = 11 : i64} {
  func.func @_ssim_kernel(%arg0: i32, %arg1: memref<16x6xf32, #tpu.memory_space<vmem>>, %arg2: memref<48x128xf32, #tpu.memory_space<vmem>>, %arg3: memref<128x16xf32, #tpu.memory_space<vmem>>, %arg4: memref<128x16xf32, #tpu.memory_space<vmem>>, %arg5: memref<1x48x1xf32, #tpu.memory_space<vmem>>) attributes {dimension_semantics = [#tpu.dimension_semantics<parallel>], iteration_bounds = array<i64: 1>, scalar_prefetch = 0 : i64, scratch_operands = 0 : i64, tpu.core_type = #tpu.core_type<tc>, window_params = [{pipeline_mode = #tpu.pipeline_mode<synchronous>, transform_indices = @transform_0, window_bounds = array<i64: 16, 6>}, {pipeline_mode = #tpu.pipeline_mode<synchronous>, transform_indices = @transform_1, window_bounds = array<i64: 48, 128>}, {transform_indices = @transform_2, window_bounds = array<i64: 128, 16>}, {transform_indices = @transform_3, window_bounds = array<i64: 128, 16>}, {transform_indices = @transform_4, window_bounds = array<i64: 1, 48, 1>}]} {
    %c0 = arith.constant 0 : index
    %c0_0 = arith.constant 0 : index
    %0 = vector.load %arg1[%c0, %c0_0] : memref<16x6xf32, #tpu.memory_space<vmem>>, vector<16x6xf32>
    %c0_1 = arith.constant 0 : index
    %c0_2 = arith.constant 0 : index
    %1 = vector.load %arg2[%c0_1, %c0_2] : memref<48x128xf32, #tpu.memory_space<vmem>>, vector<48x128xf32>
    %c0_3 = arith.constant 0 : index
    %c0_4 = arith.constant 0 : index
    %2 = vector.load %arg3[%c0_3, %c0_4] : memref<128x16xf32, #tpu.memory_space<vmem>>, vector<128x16xf32>
    %c0_5 = arith.constant 0 : index
    %c0_6 = arith.constant 0 : index
    %3 = vector.load %arg4[%c0_5, %c0_6] : memref<128x16xf32, #tpu.memory_space<vmem>>, vector<128x16xf32>
    %cst = arith.constant dense<0.000000e+00> : vector<128x6xf32>
    %4 = tpu.matmul %2, %0, %cst {dimension_numbers = #tpu.dot_dimension_numbers<[1], [0], [0], [1], [0, 0, 1, 1], [], []>} : vector<128x16xf32>, vector<16x6xf32>, vector<128x6xf32> -> vector<128x6xf32>
    %cst_7 = arith.constant dense<0.000000e+00> : vector<48x6xf32>
    %5 = tpu.matmul %1, %4, %cst_7 {dimension_numbers = #tpu.dot_dimension_numbers<[1], [0], [0], [1], [0, 0, 1, 1], [], []>} : vector<48x128xf32>, vector<128x6xf32>, vector<48x6xf32> -> vector<48x6xf32>
    %cst_8 = arith.constant dense<0.000000e+00> : vector<128x6xf32>
    %6 = tpu.matmul %3, %0, %cst_8 {dimension_numbers = #tpu.dot_dimension_numbers<[1], [0], [0], [1], [0, 0, 1, 1], [], []>} : vector<128x16xf32>, vector<16x6xf32>, vector<128x6xf32> -> vector<128x6xf32>
    %cst_9 = arith.constant dense<0.000000e+00> : vector<48x6xf32>
    %7 = tpu.matmul %1, %6, %cst_9 {dimension_numbers = #tpu.dot_dimension_numbers<[1], [0], [0], [1], [0, 0, 1, 1], [], []>} : vector<48x128xf32>, vector<128x6xf32>, vector<48x6xf32> -> vector<48x6xf32>
    %8 = arith.mulf %2, %2 : vector<128x16xf32>
    %cst_10 = arith.constant dense<0.000000e+00> : vector<128x6xf32>
    %9 = tpu.matmul %8, %0, %cst_10 {dimension_numbers = #tpu.dot_dimension_numbers<[1], [0], [0], [1], [0, 0, 1, 1], [], []>} : vector<128x16xf32>, vector<16x6xf32>, vector<128x6xf32> -> vector<128x6xf32>
    %cst_11 = arith.constant dense<0.000000e+00> : vector<48x6xf32>
    %10 = tpu.matmul %1, %9, %cst_11 {dimension_numbers = #tpu.dot_dimension_numbers<[1], [0], [0], [1], [0, 0, 1, 1], [], []>} : vector<48x128xf32>, vector<128x6xf32>, vector<48x6xf32> -> vector<48x6xf32>
    %11 = arith.mulf %3, %3 : vector<128x16xf32>
    %cst_12 = arith.constant dense<0.000000e+00> : vector<128x6xf32>
    %12 = tpu.matmul %11, %0, %cst_12 {dimension_numbers = #tpu.dot_dimension_numbers<[1], [0], [0], [1], [0, 0, 1, 1], [], []>} : vector<128x16xf32>, vector<16x6xf32>, vector<128x6xf32> -> vector<128x6xf32>
    %cst_13 = arith.constant dense<0.000000e+00> : vector<48x6xf32>
    %13 = tpu.matmul %1, %12, %cst_13 {dimension_numbers = #tpu.dot_dimension_numbers<[1], [0], [0], [1], [0, 0, 1, 1], [], []>} : vector<48x128xf32>, vector<128x6xf32>, vector<48x6xf32> -> vector<48x6xf32>
    %14 = arith.mulf %2, %3 : vector<128x16xf32>
    %cst_14 = arith.constant dense<0.000000e+00> : vector<128x6xf32>
    %15 = tpu.matmul %14, %0, %cst_14 {dimension_numbers = #tpu.dot_dimension_numbers<[1], [0], [0], [1], [0, 0, 1, 1], [], []>} : vector<128x16xf32>, vector<16x6xf32>, vector<128x6xf32> -> vector<128x6xf32>
    %cst_15 = arith.constant dense<0.000000e+00> : vector<48x6xf32>
    %16 = tpu.matmul %1, %15, %cst_15 {dimension_numbers = #tpu.dot_dimension_numbers<[1], [0], [0], [1], [0, 0, 1, 1], [], []>} : vector<48x128xf32>, vector<128x6xf32>, vector<48x6xf32> -> vector<48x6xf32>
    %17 = arith.mulf %5, %5 : vector<48x6xf32>
    %18 = arith.mulf %7, %7 : vector<48x6xf32>
    %19 = arith.mulf %5, %7 : vector<48x6xf32>
    %20 = arith.subf %10, %17 : vector<48x6xf32>
    %21 = arith.subf %13, %18 : vector<48x6xf32>
    %22 = arith.subf %16, %19 : vector<48x6xf32>
    %cst_16 = arith.constant 2.000000e+00 : f32
    %23 = vector.broadcast %cst_16 : f32 to vector<48x6xf32>
    %24 = arith.mulf %23, %19 : vector<48x6xf32>
    %cst_17 = arith.constant 9.99999974E-5 : f32
    %25 = vector.broadcast %cst_17 : f32 to vector<48x6xf32>
    %26 = arith.addf %24, %25 : vector<48x6xf32>
    %cst_18 = arith.constant 2.000000e+00 : f32
    %27 = vector.broadcast %cst_18 : f32 to vector<48x6xf32>
    %28 = arith.mulf %27, %22 : vector<48x6xf32>
    %cst_19 = arith.constant 8.99999984E-4 : f32
    %29 = vector.broadcast %cst_19 : f32 to vector<48x6xf32>
    %30 = arith.addf %28, %29 : vector<48x6xf32>
    %31 = arith.mulf %26, %30 : vector<48x6xf32>
    %32 = arith.addf %17, %18 : vector<48x6xf32>
    %cst_20 = arith.constant 9.99999974E-5 : f32
    %33 = vector.broadcast %cst_20 : f32 to vector<48x6xf32>
    %34 = arith.addf %32, %33 : vector<48x6xf32>
    %35 = arith.addf %20, %21 : vector<48x6xf32>
    %cst_21 = arith.constant 8.99999984E-4 : f32
    %36 = vector.broadcast %cst_21 : f32 to vector<48x6xf32>
    %37 = arith.addf %35, %36 : vector<48x6xf32>
    %38 = arith.mulf %34, %37 : vector<48x6xf32>
    %39 = arith.divf %31, %38 : vector<48x6xf32>
    %cst_22 = arith.constant dense<0.000000e+00> : vector<48xf32>
    %40 = vector.multi_reduction <add>, %39, %cst_22 [1] : vector<48x6xf32> to vector<48xf32>
    %41 = vector.shape_cast %40 : vector<48xf32> to vector<48x1xf32>
    %42 = vector.shape_cast %41 : vector<48x1xf32> to vector<1x48x1xf32>
    %c0_23 = arith.constant 0 : index
    %c0_24 = arith.constant 0 : index
    %c0_25 = arith.constant 0 : index
    %43 = vector.load %arg5[%c0_23, %c0_24, %c0_25] : memref<1x48x1xf32, #tpu.memory_space<vmem>>, vector<1x48x1xf32>
    tpu.vector_store %arg5[%c0_23, %c0_24, %c0_25], %42 {strides = array<i32>} : memref<1x48x1xf32, #tpu.memory_space<vmem>>, vector<1x48x1xf32>,
    return
  }
  func.func @transform_0(%arg0: i32) -> (i32, i32) {
    %c0_i32 = arith.constant 0 : i32
    %c0_i32_0 = arith.constant 0 : i32
    %c0_i32_1 = arith.constant 0 : i32
    return %c0_i32, %c0_i32_0 : i32, i32
  }
  func.func @transform_1(%arg0: i32) -> (i32, i32) {
    %c0_i32 = arith.constant 0 : i32
    %c0_i32_0 = arith.constant 0 : i32
    %c0_i32_1 = arith.constant 0 : i32
    return %c0_i32, %c0_i32_0 : i32, i32
  }
  func.func @transform_2(%arg0: i32) -> (i32, i32) {
    %c0_i32 = arith.constant 0 : i32
    %c0_i32_0 = arith.constant 0 : i32
    return %arg0, %c0_i32 : i32, i32
  }
  func.func @transform_3(%arg0: i32) -> (i32, i32) {
    %c0_i32 = arith.constant 0 : i32
    %c0_i32_0 = arith.constant 0 : i32
    return %arg0, %c0_i32 : i32, i32
  }
  func.func @transform_4(%arg0: i32) -> (i32, i32, i32) {
    %c0_i32 = arith.constant 0 : i32
    %c0_i32_0 = arith.constant 0 : i32
    %c0_i32_1 = arith.constant 0 : i32
    return %arg0, %c0_i32, %c0_i32_0 : i32, i32, i32
  }
}

</mosaic_0001>

<llo_original>
// kernel: tpu_custom_call.1
$region0: #{tpu_custom_call.1}
  #allocation0 [shape = 'u32[]', space=smem, size = 0x4, offset = 0x4, fixed_abs, tag = 'smem constant byte address 0x4 - core index']
  #allocation1 [shape = 'u32[144,128]{1,0:T(1,128)}', space=vmem, size = 0x12000, scoped, tag = 'internal scratch']
  %s0 = inlined_call_operand.vmem [shape: f32[16,6], index: 0, kind: input, shape index: {}]
  %s1 = inlined_call_operand.vmem [shape: f32[48,128], index: 1, kind: input, shape index: {}]
  %s2 = inlined_call_operand.vmem [shape: f32[128,16], index: 2, kind: input, shape index: {}]
  %s3 = inlined_call_operand.vmem [shape: f32[128,16], index: 3, kind: input, shape index: {}]
  %s4 = inlined_call_operand.vmem [shape: f32[1,48,1], index: 4, kind: output, shape index: {}]
  %s5 = sld [smem:[#allocation0]]
  $region26: #{tpu_custom_call.1} parent=0
    _
  %s7 = ssub.s32 1, %s5
  %s8 = scalar_select 0, %s7, %s5
  // Predicated region
  $region2: #{tpu_custom_call.1} parent=0 // pred_check
    _
  $region3: #{tpu_custom_call.1} parent=0 // pred_check_branch
    %10 = sbr.rel (0) target = $region5
  $region4: #{tpu_custom_call.1} parent=0 // pred_region
    _
  $region5: #{tpu_custom_call.1} parent=0 // pred_fallthru
    _
  // Predicated region
  $region6: #{tpu_custom_call.1} parent=0 // pred_check
    _
  $region7: #{tpu_custom_call.1} parent=0 // pred_check_branch
    %12 = sbr.rel (0) target = $region9
  $region8: #{tpu_custom_call.1} parent=0 // pred_region
    _
  $region9: #{tpu_custom_call.1} parent=0 // pred_fallthru
    _
  // Predicated region
  $region10: #{tpu_custom_call.1} parent=0 // pred_check
    _
  $region11: #{tpu_custom_call.1} parent=0 // pred_check_branch
    %14 = sbr.rel (0) target = $region13
  $region12: #{tpu_custom_call.1} parent=0 // pred_region
    _
  $region13: #{tpu_custom_call.1} parent=0 // pred_fallthru
    _
  // Predicated region
  $region14: #{tpu_custom_call.1} parent=0 // pred_check
    _
  $region15: #{tpu_custom_call.1} parent=0 // pred_check_branch
    %16 = sbr.rel (0) target = $region17
  $region16: #{tpu_custom_call.1} parent=0 // pred_region
    _
  $region17: #{tpu_custom_call.1} parent=0 // pred_fallthru
    _
  %v17 = vld [vmem:[%s0] sm:$0xff]
  %v18 = vld [vmem:[%s0 + $0x8] sm:$0xff]
  %v19 = vld [vmem:[%s1] sm:$0xff]
  %v20 = vld [vmem:[%s1 + $0x8] sm:$0xff]
  %v21 = vld [vmem:[%s1 + $0x10] sm:$0xff]
  %v22 = vld [vmem:[%s1 + $0x18] sm:$0xff]
  %v23 = vld [vmem:[%s1 + $0x20] sm:$0xff]
  %v24 = vld [vmem:[%s1 + $0x28] sm:$0xff]
  %v25 = vld [vmem:[%s2] sm:$0xff]
  %v26 = vld [vmem:[%s2 + $0x8] sm:$0xff]
  %v27 = vld [vmem:[%s2 + $0x10] sm:$0xff]
  %v28 = vld [vmem:[%s2 + $0x18] sm:$0xff]
  %v29 = vld [vmem:[%s2 + $0x20] sm:$0xff]
  %v30 = vld [vmem:[%s2 + $0x28] sm:$0xff]
  %v31 = vld [vmem:[%s2 + $0x30] sm:$0xff]
  %v32 = vld [vmem:[%s2 + $0x38] sm:$0xff]
  %v33 = vld [vmem:[%s2 + $0x40] sm:$0xff]
  %v34 = vld [vmem:[%s2 + $0x48] sm:$0xff]
  %v35 = vld [vmem:[%s2 + $0x50] sm:$0xff]
  %v36 = vld [vmem:[%s2 + $0x58] sm:$0xff]
  %v37 = vld [vmem:[%s2 + $0x60] sm:$0xff]
  %v38 = vld [vmem:[%s2 + $0x68] sm:$0xff]
  %v39 = vld [vmem:[%s2 + $0x70] sm:$0xff]
  %v40 = vld [vmem:[%s2 + $0x78] sm:$0xff]
  %v41 = vld [vmem:[%s3] sm:$0xff]
  %v42 = vld [vmem:[%s3 + $0x8] sm:$0xff]
  %v43 = vld [vmem:[%s3 + $0x10] sm:$0xff]
  %v44 = vld [vmem:[%s3 + $0x18] sm:$0xff]
  %v45 = vld [vmem:[%s3 + $0x20] sm:$0xff]
  %v46 = vld [vmem:[%s3 + $0x28] sm:$0xff]
  %v47 = vld [vmem:[%s3 + $0x30] sm:$0xff]
  %v48 = vld [vmem:[%s3 + $0x38] sm:$0xff]
  %v49 = vld [vmem:[%s3 + $0x40] sm:$0xff]
  %v50 = vld [vmem:[%s3 + $0x48] sm:$0xff]
  %v51 = vld [vmem:[%s3 + $0x50] sm:$0xff]
  %v52 = vld [vmem:[%s3 + $0x58] sm:$0xff]
  %v53 = vld [vmem:[%s3 + $0x60] sm:$0xff]
  %v54 = vld [vmem:[%s3 + $0x68] sm:$0xff]
  %v55 = vld [vmem:[%s3 + $0x70] sm:$0xff]
  %v56 = vld [vmem:[%s3 + $0x78] sm:$0xff]
  %vm57 = vcmask 130048
  %v59 = vsel %vm57, %v25, 0
  %v62 = vsel %vm57, %v26, 0
  %v65 = vsel %vm57, %v27, 0
  %v68 = vsel %vm57, %v28, 0
  %v71 = vsel %vm57, %v29, 0
  %v74 = vsel %vm57, %v30, 0
  %v77 = vsel %vm57, %v31, 0
  %v80 = vsel %vm57, %v32, 0
  %v83 = vsel %vm57, %v33, 0
  %v86 = vsel %vm57, %v34, 0
  %v89 = vsel %vm57, %v35, 0
  %v92 = vsel %vm57, %v36, 0
  %v95 = vsel %vm57, %v37, 0
  %v98 = vsel %vm57, %v38, 0
  %v101 = vsel %vm57, %v39, 0
  %v104 = vsel %vm57, %v40, 0
  %106 = vmatprep.subr.mxu0 0.0
  %107 = vmatpush1.msra.mxu0 %v17
  %108 = vmatprep.subr.mxu0 0.0
  %109 = vmatpush1.msra.mxu0 %v18
  %110 = vmatprep.subr.mxu0 0.0
  %111 = vmatpush1.msra.mxu0 0.0
  %112 = vmatprep.subr.mxu0 0.0
  %113 = vmatpush1.msra.mxu0 0.0
  %114 = vmatprep.subr.mxu0 0.0
  %115 = vmatpush1.msra.mxu0 0.0
  %116 = vmatprep.subr.mxu0 0.0
  %117 = vmatpush1.msra.mxu0 0.0
  %118 = vmatprep.subr.mxu0 0.0
  %119 = vmatpush1.msra.mxu0 0.0
  %120 = vmatprep.subr.mxu0 0.0
  %121 = vmatpush1.msra.mxu0 0.0
  %122 = vmatprep.subr.mxu0 0.0
  %123 = vmatpush1.msra.mxu0 0.0
  %124 = vmatprep.subr.mxu0 0.0
  %125 = vmatpush1.msra.mxu0 0.0
  %126 = vmatprep.subr.mxu0 0.0
  %127 = vmatpush1.msra.mxu0 0.0
  %128 = vmatprep.subr.mxu0 0.0
  %129 = vmatpush1.msra.mxu0 0.0
  %130 = vmatprep.subr.mxu0 0.0
  %131 = vmatpush1.msra.mxu0 0.0
  %132 = vmatprep.subr.mxu0 0.0
  %133 = vmatpush1.msra.mxu0 0.0
  %134 = vmatprep.subr.mxu0 0.0
  %135 = vmatpush1.msra.mxu0 0.0
  %136 = vmatprep.subr.mxu0 0.0
  %137 = vmatpush1.msra.mxu0 0.0
  %138 = vmatprep.subr.mxu0 0.0
  %139 = vmatpush1.msra.mxu0 0.0
  %140 = vmatprep.subr.mxu0 0.0
  %141 = vmatpush1.msra.mxu0 0.0
  %142 = vmatprep.subr.mxu0 0.0
  %143 = vmatpush1.msra.mxu0 0.0
  %144 = vmatprep.subr.mxu0 0.0
  %145 = vmatpush1.msra.mxu0 0.0
  %146 = vmatprep.subr.mxu0 0.0
  %147 = vmatpush1.msra.mxu0 0.0
  %148 = vmatprep.subr.mxu0 0.0
  %149 = vmatpush1.msra.mxu0 0.0
  %150 = vmatprep.subr.mxu0 0.0
  %151 = vmatpush1.msra.mxu0 0.0
  %152 = vmatprep.subr.mxu0 0.0
  %153 = vmatpush1.msra.mxu0 0.0
  %154 = vmatprep.subr.mxu0 0.0
  %155 = vmatpush1.msra.mxu0 0.0
  %156 = vmatprep.subr.mxu0 0.0
  %157 = vmatpush1.msra.mxu0 0.0
  %158 = vmatprep.subr.mxu0 0.0
  %159 = vmatpush1.msra.mxu0 0.0
  %160 = vmatprep.subr.mxu0 0.0
  %161 = vmatpush1.msra.mxu0 0.0
  %162 = vmatprep.subr.mxu0 0.0
  %163 = vmatpush1.msra.mxu0 0.0
  %164 = vmatprep.subr.mxu0 0.0
  %165 = vmatpush1.msra.mxu0 0.0
  %166 = vmatprep.subr.mxu0 0.0
  %167 = vmatpush1.msra.mxu0 0.0
  %168 = vmatprep.subr.mxu0 0.0
  %169 = vmatpush1.msra.mxu0 0.0
  %170 = vmatprep.mubr.f32.mxu0 0.0
  %171 = vmatmul.mubr.f32.gmra.mrb[0].mxu0 %v59
  %v172 = vpop.f32.mrb[0].mxu0
  %v173 = vadd.f32 0.0, %v172
  %v174 = vpop.f32.mrb[0].mxu0
  %175 = vmatprep.mubr.f32.mxu0 0.0
  %176 = vmatmul.mubr.f32.gmra.mrb[0].mxu0 %v62
  %v177 = vpop.f32.mrb[0].mxu0
  %v178 = vadd.f32 0.0, %v177
  %v179 = vpop.f32.mrb[0].mxu0
  %180 = vmatprep.mubr.f32.mxu0 0.0
  %181 = vmatmul.mubr.f32.gmra.mrb[0].mxu0 %v65
  %v182 = vpop.f32.mrb[0].mxu0
  %v183 = vadd.f32 0.0, %v182
  %v184 = vpop.f32.mrb[0].mxu0
  %185 = vmatprep.mubr.f32.mxu0 0.0
  %186 = vmatmul.mubr.f32.gmra.mrb[0].mxu0 %v68
  %v187 = vpop.f32.mrb[0].mxu0
  %v188 = vadd.f32 0.0, %v187
  %v189 = vpop.f32.mrb[0].mxu0
  %190 = vmatprep.mubr.f32.mxu0 0.0
  %191 = vmatmul.mubr.f32.gmra.mrb[0].mxu0 %v71
  %v192 = vpop.f32.mrb[0].mxu0
  %v193 = vadd.f32 0.0, %v192
  %v194 = vpop.f32.mrb[0].mxu0
  %195 = vmatprep.mubr.f32.mxu0 0.0
  %196 = vmatmul.mubr.f32.gmra.mrb[0].mxu0 %v74
  %v197 = vpop.f32.mrb[0].mxu0
  %v198 = vadd.f32 0.0, %v197
  %v199 = vpop.f32.mrb[0].mxu0
  %200 = vmatprep.mubr.f32.mxu0 0.0
  %201 = vmatmul.mubr.f32.gmra.mrb[0].mxu0 %v77
  %v202 = vpop.f32.mrb[0].mxu0
  %v203 = vadd.f32 0.0, %v202
  %v204 = vpop.f32.mrb[0].mxu0
  %205 = vmatprep.mubr.f32.mxu0 0.0
  %206 = vmatmul.mubr.f32.gmra.mrb[0].mxu0 %v80
  %v207 = vpop.f32.mrb[0].mxu0
  %v208 = vadd.f32 0.0, %v207
  %v209 = vpop.f32.mrb[0].mxu0
  %210 = vmatprep.mubr.f32.mxu0 0.0
  %211 = vmatmul.mubr.f32.gmra.mrb[0].mxu0 %v83
  %v212 = vpop.f32.mrb[0].mxu0
  %v213 = vadd.f32 0.0, %v212
  %v214 = vpop.f32.mrb[0].mxu0
  %215 = vmatprep.mubr.f32.mxu0 0.0
  %216 = vmatmul.mubr.f32.gmra.mrb[0].mxu0 %v86
  %v217 = vpop.f32.mrb[0].mxu0
  %v218 = vadd.f32 0.0, %v217
  %v219 = vpop.f32.mrb[0].mxu0
  %220 = vmatprep.mubr.f32.mxu0 0.0
  %221 = vmatmul.mubr.f32.gmra.mrb[0].mxu0 %v89
  %v222 = vpop.f32.mrb[0].mxu0
  %v223 = vadd.f32 0.0, %v222
  %v224 = vpop.f32.mrb[0].mxu0
  %225 = vmatprep.mubr.f32.mxu0 0.0
  %226 = vmatmul.mubr.f32.gmra.mrb[0].mxu0 %v92
  %v227 = vpop.f32.mrb[0].mxu0
  %v228 = vadd.f32 0.0, %v227
  %v229 = vpop.f32.mrb[0].mxu0
  %230 = vmatprep.mubr.f32.mxu0 0.0
  %231 = vmatmul.mubr.f32.gmra.mrb[0].mxu0 %v95
  %v232 = vpop.f32.mrb[0].mxu0
  %v233 = vadd.f32 0.0, %v232
  %v234 = vpop.f32.mrb[0].mxu0
  %235 = vmatprep.mubr.f32.mxu0 0.0
  %236 = vmatmul.mubr.f32.gmra.mrb[0].mxu0 %v98
  %v237 = vpop.f32.mrb[0].mxu0
  %v238 = vadd.f32 0.0, %v237
  %v239 = vpop.f32.mrb[0].mxu0
  %240 = vmatprep.mubr.f32.mxu0 0.0
  %241 = vmatmul.mubr.f32.gmra.mrb[0].mxu0 %v101
  %v242 = vpop.f32.mrb[0].mxu0
  %v243 = vadd.f32 0.0, %v242
  %v244 = vpop.f32.mrb[0].mxu0
  %245 = vmatprep.mubr.f32.mxu0 0.0
  %246 = vmatmul.mubr.f32.gmra.mrb[0].mxu0 %v104
  %v247 = vpop.f32.mrb[0].mxu0
  %v248 = vadd.f32 0.0, %v247
  %v249 = vpop.f32.mrb[0].mxu0
  %250 = vdwg.mxu0
  %251 = vmatprep.subr.mxu0 0.0
  %252 = vmatpush1.msra.mxu0 %v173
  %253 = vmatprep.subr.mxu0 0.0
  %254 = vmatpush1.msra.mxu0 %v178
  %255 = vmatprep.subr.mxu0 0.0
  %256 = vmatpush1.msra.mxu0 %v183
  %257 = vmatprep.subr.mxu0 0.0
  %258 = vmatpush1.msra.mxu0 %v188
  %259 = vmatprep.subr.mxu0 0.0
  %260 = vmatpush1.msra.mxu0 %v193
  %261 = vmatprep.subr.mxu0 0.0
  %262 = vmatpush1.msra.mxu0 %v198
  %263 = vmatprep.subr.mxu0 0.0
  %264 = vmatpush1.msra.mxu0 %v203
  %265 = vmatprep.subr.mxu0 0.0
  %266 = vmatpush1.msra.mxu0 %v208
  %267 = vmatprep.subr.mxu0 0.0
  %268 = vmatpush1.msra.mxu0 %v213
  %269 = vmatprep.subr.mxu0 0.0
  %270 = vmatpush1.msra.mxu0 %v218
  %271 = vmatprep.subr.mxu0 0.0
  %272 = vmatpush1.msra.mxu0 %v223
  %273 = vmatprep.subr.mxu0 0.0
  %274 = vmatpush1.msra.mxu0 %v228
  %275 = vmatprep.subr.mxu0 0.0
  %276 = vmatpush1.msra.mxu0 %v233
  %277 = vmatprep.subr.mxu0 0.0
  %278 = vmatpush1.msra.mxu0 %v238
  %279 = vmatprep.subr.mxu0 0.0
  %280 = vmatpush1.msra.mxu0 %v243
  %281 = vmatprep.subr.mxu0 0.0
  %282 = vmatpush1.msra.mxu0 %v248
  %283 = vmatprep.subr.mxu0 0.0
  %284 = vmatpush1.msra.mxu0 0.0
  %285 = vmatprep.subr.mxu0 0.0
  %286 = vmatpush1.msra.mxu0 0.0
  %287 = vmatprep.subr.mxu0 0.0
  %288 = vmatpush1.msra.mxu0 0.0
  %289 = vmatprep.subr.mxu0 0.0
  %290 = vmatpush1.msra.mxu0 0.0
  %291 = vmatprep.subr.mxu0 0.0
  %292 = vmatpush1.msra.mxu0 0.0
  %293 = vmatprep.subr.mxu0 0.0
  %294 = vmatpush1.msra.mxu0 0.0
  %295 = vmatprep.subr.mxu0 0.0
  %296 = vmatpush1.msra.mxu0 0.0
  %297 = vmatprep.subr.mxu0 0.0
  %298 = vmatpush1.msra.mxu0 0.0
  %299 = vmatprep.subr.mxu0 0.0
  %300 = vmatpush1.msra.mxu0 0.0
  %301 = vmatprep.subr.mxu0 0.0
  %302 = vmatpush1.msra.mxu0 0.0
  %303 = vmatprep.subr.mxu0 0.0
  %304 = vmatpush1.msra.mxu0 0.0
  %305 = vmatprep.subr.mxu0 0.0
  %306 = vmatpush1.msra.mxu0 0.0
  %307 = vmatprep.subr.mxu0 0.0
  %308 = vmatpush1.msra.mxu0 0.0
  %309 = vmatprep.subr.mxu0 0.0
  %310 = vmatpush1.msra.mxu0 0.0
  %311 = vmatprep.subr.mxu0 0.0
  %312 = vmatpush1.msra.mxu0 0.0
  %313 = vmatprep.subr.mxu0 0.0
  %314 = vmatpush1.msra.mxu0 0.0
  %315 = vmatprep.mubr.f32.mxu0 0.0
  %316 = vmatmul.mubr.f32.gmra.mrb[0].mxu0 %v19
  %v317 = vpop.f32.mrb[0].mxu0
  %v318 = vadd.f32 0.0, %v317
  %v319 = vpop.f32.mrb[0].mxu0
  %320 = vmatprep.mubr.f32.mxu0 0.0
  %321 = vmatmul.mubr.f32.gmra.mrb[0].mxu0 %v20
  %v322 = vpop.f32.mrb[0].mxu0
  %v323 = vadd.f32 0.0, %v322
  %v324 = vpop.f32.mrb[0].mxu0
  %325 = vmatprep.mubr.f32.mxu0 0.0
  %326 = vmatmul.mubr.f32.gmra.mrb[0].mxu0 %v21
  %v327 = vpop.f32.mrb[0].mxu0
  %v328 = vadd.f32 0.0, %v327
  %v329 = vpop.f32.mrb[0].mxu0
  %330 = vmatprep.mubr.f32.mxu0 0.0
  %331 = vmatmul.mubr.f32.gmra.mrb[0].mxu0 %v22
  %v332 = vpop.f32.mrb[0].mxu0
  %v333 = vadd.f32 0.0, %v332
  %v334 = vpop.f32.mrb[0].mxu0
  %335 = vmatprep.mubr.f32.mxu0 0.0
  %336 = vmatmul.mubr.f32.gmra.mrb[0].mxu0 %v23
  %v337 = vpop.f32.mrb[0].mxu0
  %v338 = vadd.f32 0.0, %v337
  %v339 = vpop.f32.mrb[0].mxu0
  %340 = vmatprep.mubr.f32.mxu0 0.0
  %341 = vmatmul.mubr.f32.gmra.mrb[0].mxu0 %v24
  %v342 = vpop.f32.mrb[0].mxu0
  %v343 = vadd.f32 0.0, %v342
  %v344 = vpop.f32.mrb[0].mxu0
  %345 = vdwg.mxu0
  %v347 = vsel %vm57, %v41, 0
  %v350 = vsel %vm57, %v42, 0
  %v353 = vsel %vm57, %v43, 0
  %v356 = vsel %vm57, %v44, 0
  %v359 = vsel %vm57, %v45, 0
  %v362 = vsel %vm57, %v46, 0
  %v365 = vsel %vm57, %v47, 0
  %v368 = vsel %vm57, %v48, 0
  %v371 = vsel %vm57, %v49, 0
  %v374 = vsel %vm57, %v50, 0
  %v377 = vsel %vm57, %v51, 0
  %v380 = vsel %vm57, %v52, 0
  %v383 = vsel %vm57, %v53, 0
  %v386 = vsel %vm57, %v54, 0
  %v389 = vsel %vm57, %v55, 0
  %v392 = vsel %vm57, %v56, 0
  %394 = vmatprep.subr.mxu0 0.0
  %395 = vmatpush1.msra.mxu0 %v17
  %396 = vmatprep.subr.mxu0 0.0
  %397 = vmatpush1.msra.mxu0 %v18
  %398 = vmatprep.subr.mxu0 0.0
  %399 = vmatpush1.msra.mxu0 0.0
  %400 = vmatprep.subr.mxu0 0.0
  %401 = vmatpush1.msra.mxu0 0.0
  %402 = vmatprep.subr.mxu0 0.0
  %403 = vmatpush1.msra.mxu0 0.0
  %404 = vmatprep.subr.mxu0 0.0
  %405 = vmatpush1.msra.mxu0 0.0
  %406 = vmatprep.subr.mxu0 0.0
  %407 = vmatpush1.msra.mxu0 0.0
  %408 = vmatprep.subr.mxu0 0.0
  %409 = vmatpush1.msra.mxu0 0.0
  %410 = vmatprep.subr.mxu0 0.0
  %411 = vmatpush1.msra.mxu0 0.0
  %412 = vmatprep.subr.mxu0 0.0
  %413 = vmatpush1.msra.mxu0 0.0
  %414 = vmatprep.subr.mxu0 0.0
  %415 = vmatpush1.msra.mxu0 0.0
  %416 = vmatprep.subr.mxu0 0.0
  %417 = vmatpush1.msra.mxu0 0.0
  %418 = vmatprep.subr.mxu0 0.0
  %419 = vmatpush1.msra.mxu0 0.0
  %420 = vmatprep.subr.mxu0 0.0
  %421 = vmatpush1.msra.mxu0 0.0
  %422 = vmatprep.subr.mxu0 0.0
  %423 = vmatpush1.msra.mxu0 0.0
  %424 = vmatprep.subr.mxu0 0.0
  %425 = vmatpush1.msra.mxu0 0.0
  %426 = vmatprep.subr.mxu0 0.0
  %427 = vmatpush1.msra.mxu0 0.0
  %428 = vmatprep.subr.mxu0 0.0
  %429 = vmatpush1.msra.mxu0 0.0
  %430 = vmatprep.subr.mxu0 0.0
  %431 = vmatpush1.msra.mxu0 0.0
  %432 = vmatprep.subr.mxu0 0.0
  %433 = vmatpush1.msra.mxu0 0.0
  %434 = vmatprep.subr.mxu0 0.0
  %435 = vmatpush1.msra.mxu0 0.0
  %436 = vmatprep.subr.mxu0 0.0
  %437 = vmatpush1.msra.mxu0 0.0
  %438 = vmatprep.subr.mxu0 0.0
  %439 = vmatpush1.msra.mxu0 0.0
  %440 = vmatprep.subr.mxu0 0.0
  %441 = vmatpush1.msra.mxu0 0.0
  %442 = vmatprep.subr.mxu0 0.0
  %443 = vmatpush1.msra.mxu0 0.0
  %444 = vmatprep.subr.mxu0 0.0
  %445 = vmatpush1.msra.mxu0 0.0
  %446 = vmatprep.subr.mxu0 0.0
  %447 = vmatpush1.msra.mxu0 0.0
  %448 = vmatprep.subr.mxu0 0.0
  %449 = vmatpush1.msra.mxu0 0.0
  %450 = vmatprep.subr.mxu0 0.0
  %451 = vmatpush1.msra.mxu0 0.0
  %452 = vmatprep.subr.mxu0 0.0
  %453 = vmatpush1.msra.mxu0 0.0
  %454 = vmatprep.subr.mxu0 0.0
  %455 = vmatpush1.msra.mxu0 0.0
  %456 = vmatprep.subr.mxu0 0.0
  %457 = vmatpush1.msra.mxu0 0.0
  %458 = vmatprep.mubr.f32.mxu0 0.0
  %459 = vmatmul.mubr.f32.gmra.mrb[0].mxu0 %v347
  %v460 = vpop.f32.mrb[0].mxu0
  %v461 = vadd.f32 0.0, %v460
  %v462 = vpop.f32.mrb[0].mxu0
  %463 = vmatprep.mubr.f32.mxu0 0.0
  %464 = vmatmul.mubr.f32.gmra.mrb[0].mxu0 %v350
  %v465 = vpop.f32.mrb[0].mxu0
  %v466 = vadd.f32 0.0, %v465
  %v467 = vpop.f32.mrb[0].mxu0
  %468 = vmatprep.mubr.f32.mxu0 0.0
  %469 = vmatmul.mubr.f32.gmra.mrb[0].mxu0 %v353
  %v470 = vpop.f32.mrb[0].mxu0
  %v471 = vadd.f32 0.0, %v470
  %v472 = vpop.f32.mrb[0].mxu0
  %473 = vmatprep.mubr.f32.mxu0 0.0
  %474 = vmatmul.mubr.f32.gmra.mrb[0].mxu0 %v356
  %v475 = vpop.f32.mrb[0].mxu0
  %v476 = vadd.f32 0.0, %v475
  %v477 = vpop.f32.mrb[0].mxu0
  %478 = vmatprep.mubr.f32.mxu0 0.0
  %479 = vmatmul.mubr.f32.gmra.mrb[0].mxu0 %v359
  %v480 = vpop.f32.mrb[0].mxu0
  %v481 = vadd.f32 0.0, %v480
  %v482 = vpop.f32.mrb[0].mxu0
  %483 = vmatprep.mubr.f32.mxu0 0.0
  %484 = vmatmul.mubr.f32.gmra.mrb[0].mxu0 %v362
  %v485 = vpop.f32.mrb[0].mxu0
  %v486 = vadd.f32 0.0, %v485
  %v487 = vpop.f32.mrb[0].mxu0
  %488 = vmatprep.mubr.f32.mxu0 0.0
  %489 = vmatmul.mubr.f32.gmra.mrb[0].mxu0 %v365
  %v490 = vpop.f32.mrb[0].mxu0
  %v491 = vadd.f32 0.0, %v490
  %v492 = vpop.f32.mrb[0].mxu0
  %493 = vmatprep.mubr.f32.mxu0 0.0
  %494 = vmatmul.mubr.f32.gmra.mrb[0].mxu0 %v368
  %v495 = vpop.f32.mrb[0].mxu0
  %v496 = vadd.f32 0.0, %v495
  %v497 = vpop.f32.mrb[0].mxu0
  %498 = vmatprep.mubr.f32.mxu0 0.0
  %499 = vmatmul.mubr.f32.gmra.mrb[0].mxu0 %v371
  %v500 = vpop.f32.mrb[0].mxu0
  %v501 = vadd.f32 0.0, %v500
  %v502 = vpop.f32.mrb[0].mxu0
  %503 = vmatprep.mubr.f32.mxu0 0.0
  %504 = vmatmul.mubr.f32.gmra.mrb[0].mxu0 %v374
  %v505 = vpop.f32.mrb[0].mxu0
  %v506 = vadd.f32 0.0, %v505
  %v507 = vpop.f32.mrb[0].mxu0
  %508 = vmatprep.mubr.f32.mxu0 0.0
  %509 = vmatmul.mubr.f32.gmra.mrb[0].mxu0 %v377
  %v510 = vpop.f32.mrb[0].mxu0
  %v511 = vadd.f32 0.0, %v510
  %v512 = vpop.f32.mrb[0].mxu0
  %513 = vmatprep.mubr.f32.mxu0 0.0
  %514 = vmatmul.mubr.f32.gmra.mrb[0].mxu0 %v380
  %v515 = vpop.f32.mrb[0].mxu0
  %v516 = vadd.f32 0.0, %v515
  %v517 = vpop.f32.mrb[0].mxu0
  %518 = vmatprep.mubr.f32.mxu0 0.0
  %519 = vmatmul.mubr.f32.gmra.mrb[0].mxu0 %v383
  %v520 = vpop.f32.mrb[0].mxu0
  %v521 = vadd.f32 0.0, %v520
  %v522 = vpop.f32.mrb[0].mxu0
  %523 = vmatprep.mubr.f32.mxu0 0.0
  %524 = vmatmul.mubr.f32.gmra.mrb[0].mxu0 %v386
  %v525 = vpop.f32.mrb[0].mxu0
  %v526 = vadd.f32 0.0, %v525
  %v527 = vpop.f32.mrb[0].mxu0
  %528 = vmatprep.mubr.f32.mxu0 0.0
  %529 = vmatmul.mubr.f32.gmra.mrb[0].mxu0 %v389
  %v530 = vpop.f32.mrb[0].mxu0
  %v531 = vadd.f32 0.0, %v530
  %v532 = vpop.f32.mrb[0].mxu0
  %533 = vmatprep.mubr.f32.mxu0 0.0
  %534 = vmatmul.mubr.f32.gmra.mrb[0].mxu0 %v392
  %v535 = vpop.f32.mrb[0].mxu0
  %v536 = vadd.f32 0.0, %v535
  %v537 = vpop.f32.mrb[0].mxu0
  %538 = vdwg.mxu0
  %539 = vmatprep.subr.mxu0 0.0
  %540 = vmatpush1.msra.mxu0 %v461
  %541 = vmatprep.subr.mxu0 0.0
  %542 = vmatpush1.msra.mxu0 %v466
  %543 = vmatprep.subr.mxu0 0.0
  %544 = vmatpush1.msra.mxu0 %v471
  %545 = vmatprep.subr.mxu0 0.0
  %546 = vmatpush1.msra.mxu0 %v476
  %547 = vmatprep.subr.mxu0 0.0
  %548 = vmatpush1.msra.mxu0 %v481
  %549 = vmatprep.subr.mxu0 0.0
  %550 = vmatpush1.msra.mxu0 %v486
  %551 = vmatprep.subr.mxu0 0.0
  %552 = vmatpush1.msra.mxu0 %v491
  %553 = vmatprep.subr.mxu0 0.0
  %554 = vmatpush1.msra.mxu0 %v496
  %555 = vmatprep.subr.mxu0 0.0
  %556 = vmatpush1.msra.mxu0 %v501
  %557 = vmatprep.subr.mxu0 0.0
  %558 = vmatpush1.msra.mxu0 %v506
  %559 = vmatprep.subr.mxu0 0.0
  %560 = vmatpush1.msra.mxu0 %v511
  %561 = vmatprep.subr.mxu0 0.0
  %562 = vmatpush1.msra.mxu0 %v516
  %563 = vmatprep.subr.mxu0 0.0
  %564 = vmatpush1.msra.mxu0 %v521
  %565 = vmatprep.subr.mxu0 0.0
  %566 = vmatpush1.msra.mxu0 %v526
  %567 = vmatprep.subr.mxu0 0.0
  %568 = vmatpush1.msra.mxu0 %v531
  %569 = vmatprep.subr.mxu0 0.0
  %570 = vmatpush1.msra.mxu0 %v536
  %571 = vmatprep.subr.mxu0 0.0
  %572 = vmatpush1.msra.mxu0 0.0
  %573 = vmatprep.subr.mxu0 0.0
  %574 = vmatpush1.msra.mxu0 0.0
  %575 = vmatprep.subr.mxu0 0.0
  %576 = vmatpush1.msra.mxu0 0.0
  %577 = vmatprep.subr.mxu0 0.0
  %578 = vmatpush1.msra.mxu0 0.0
  %579 = vmatprep.subr.mxu0 0.0
  %580 = vmatpush1.msra.mxu0 0.0
  %581 = vmatprep.subr.mxu0 0.0
  %582 = vmatpush1.msra.mxu0 0.0
  %583 = vmatprep.subr.mxu0 0.0
  %584 = vmatpush1.msra.mxu0 0.0
  %585 = vmatprep.subr.mxu0 0.0
  %586 = vmatpush1.msra.mxu0 0.0
  %587 = vmatprep.subr.mxu0 0.0
  %588 = vmatpush1.msra.mxu0 0.0
  %589 = vmatprep.subr.mxu0 0.0
  %590 = vmatpush1.msra.mxu0 0.0
  %591 = vmatprep.subr.mxu0 0.0
  %592 = vmatpush1.msra.mxu0 0.0
  %593 = vmatprep.subr.mxu0 0.0
  %594 = vmatpush1.msra.mxu0 0.0
  %595 = vmatprep.subr.mxu0 0.0
  %596 = vmatpush1.msra.mxu0 0.0
  %597 = vmatprep.subr.mxu0 0.0
  %598 = vmatpush1.msra.mxu0 0.0
  %599 = vmatprep.subr.mxu0 0.0
  %600 = vmatpush1.msra.mxu0 0.0
  %601 = vmatprep.subr.mxu0 0.0
  %602 = vmatpush1.msra.mxu0 0.0
  %603 = vmatprep.mubr.f32.mxu0 0.0
  %604 = vmatmul.mubr.f32.gmra.mrb[0].mxu0 %v19
  %v605 = vpop.f32.mrb[0].mxu0
  %v606 = vadd.f32 0.0, %v605
  %v607 = vpop.f32.mrb[0].mxu0
  %608 = vmatprep.mubr.f32.mxu0 0.0
  %609 = vmatmul.mubr.f32.gmra.mrb[0].mxu0 %v20
  %v610 = vpop.f32.mrb[0].mxu0
  %v611 = vadd.f32 0.0, %v610
  %v612 = vpop.f32.mrb[0].mxu0
  %613 = vmatprep.mubr.f32.mxu0 0.0
  %614 = vmatmul.mubr.f32.gmra.mrb[0].mxu0 %v21
  %v615 = vpop.f32.mrb[0].mxu0
  %v616 = vadd.f32 0.0, %v615
  %v617 = vpop.f32.mrb[0].mxu0
  %618 = vmatprep.mubr.f32.mxu0 0.0
  %619 = vmatmul.mubr.f32.gmra.mrb[0].mxu0 %v22
  %v620 = vpop.f32.mrb[0].mxu0
  %v621 = vadd.f32 0.0, %v620
  %v622 = vpop.f32.mrb[0].mxu0
  %623 = vmatprep.mubr.f32.mxu0 0.0
  %624 = vmatmul.mubr.f32.gmra.mrb[0].mxu0 %v23
  %v625 = vpop.f32.mrb[0].mxu0
  %v626 = vadd.f32 0.0, %v625
  %v627 = vpop.f32.mrb[0].mxu0
  %628 = vmatprep.mubr.f32.mxu0 0.0
  %629 = vmatmul.mubr.f32.gmra.mrb[0].mxu0 %v24
  %v630 = vpop.f32.mrb[0].mxu0
  %v631 = vadd.f32 0.0, %v630
  %v632 = vpop.f32.mrb[0].mxu0
  %633 = vdwg.mxu0
  %v634 = vmul.f32 %v25, %v25
  %v635 = vmul.f32 %v26, %v26
  %v636 = vmul.f32 %v27, %v27
  %v637 = vmul.f32 %v28, %v28
  %v638 = vmul.f32 %v29, %v29
  %v639 = vmul.f32 %v30, %v30
  %v640 = vmul.f32 %v31, %v31
  %v641 = vmul.f32 %v32, %v32
  %v642 = vmul.f32 %v33, %v33
  %v643 = vmul.f32 %v34, %v34
  %v644 = vmul.f32 %v35, %v35
  %v645 = vmul.f32 %v36, %v36
  %v646 = vmul.f32 %v37, %v37
  %v647 = vmul.f32 %v38, %v38
  %v648 = vmul.f32 %v39, %v39
  %v649 = vmul.f32 %v40, %v40
  %v651 = vsel %vm57, %v634, 0
  %v654 = vsel %vm57, %v635, 0
  %v657 = vsel %vm57, %v636, 0
  %v660 = vsel %vm57, %v637, 0
  %v663 = vsel %vm57, %v638, 0
  %v666 = vsel %vm57, %v639, 0
  %v669 = vsel %vm57, %v640, 0
  %v672 = vsel %vm57, %v641, 0
  %v675 = vsel %vm57, %v642, 0
  %v678 = vsel %vm57, %v643, 0
  %v681 = vsel %vm57, %v644, 0
  %v684 = vsel %vm57, %v645, 0
  %v687 = vsel %vm57, %v646, 0
  %v690 = vsel %vm57, %v647, 0
  %v693 = vsel %vm57, %v648, 0
  %v696 = vsel %vm57, %v649, 0
  %698 = vmatprep.subr.mxu0 0.0
  %699 = vmatpush1.msra.mxu0 %v17
  %700 = vmatprep.subr.mxu0 0.0
  %701 = vmatpush1.msra.mxu0 %v18
  %702 = vmatprep.subr.mxu0 0.0
  %703 = vmatpush1.msra.mxu0 0.0
  %704 = vmatprep.subr.mxu0 0.0
  %705 = vmatpush1.msra.mxu0 0.0
  %706 = vmatprep.subr.mxu0 0.0
  %707 = vmatpush1.msra.mxu0 0.0
  %708 = vmatprep.subr.mxu0 0.0
  %709 = vmatpush1.msra.mxu0 0.0
  %710 = vmatprep.subr.mxu0 0.0
  %711 = vmatpush1.msra.mxu0 0.0
  %712 = vmatprep.subr.mxu0 0.0
  %713 = vmatpush1.msra.mxu0 0.0
  %714 = vmatprep.subr.mxu0 0.0
  %715 = vmatpush1.msra.mxu0 0.0
  %716 = vmatprep.subr.mxu0 0.0
  %717 = vmatpush1.msra.mxu0 0.0
  %718 = vmatprep.subr.mxu0 0.0
  %719 = vmatpush1.msra.mxu0 0.0
  %720 = vmatprep.subr.mxu0 0.0
  %721 = vmatpush1.msra.mxu0 0.0
  %722 = vmatprep.subr.mxu0 0.0
  %723 = vmatpush1.msra.mxu0 0.0
  %724 = vmatprep.subr.mxu0 0.0
  %725 = vmatpush1.msra.mxu0 0.0
  %726 = vmatprep.subr.mxu0 0.0
  %727 = vmatpush1.msra.mxu0 0.0
  %728 = vmatprep.subr.mxu0 0.0
  %729 = vmatpush1.msra.mxu0 0.0
  %730 = vmatprep.subr.mxu0 0.0
  %731 = vmatpush1.msra.mxu0 0.0
  %732 = vmatprep.subr.mxu0 0.0
  %733 = vmatpush1.msra.mxu0 0.0
  %734 = vmatprep.subr.mxu0 0.0
  %735 = vmatpush1.msra.mxu0 0.0
  %736 = vmatprep.subr.mxu0 0.0
  %737 = vmatpush1.msra.mxu0 0.0
  %738 = vmatprep.subr.mxu0 0.0
  %739 = vmatpush1.msra.mxu0 0.0
  %740 = vmatprep.subr.mxu0 0.0
  %741 = vmatpush1.msra.mxu0 0.0
  %742 = vmatprep.subr.mxu0 0.0
  %743 = vmatpush1.msra.mxu0 0.0
  %744 = vmatprep.subr.mxu0 0.0
  %745 = vmatpush1.msra.mxu0 0.0
  %746 = vmatprep.subr.mxu0 0.0
  %747 = vmatpush1.msra.mxu0 0.0
  %748 = vmatprep.subr.mxu0 0.0
  %749 = vmatpush1.msra.mxu0 0.0
  %750 = vmatprep.subr.mxu0 0.0
  %751 = vmatpush1.msra.mxu0 0.0
  %752 = vmatprep.subr.mxu0 0.0
  %753 = vmatpush1.msra.mxu0 0.0
  %754 = vmatprep.subr.mxu0 0.0
  %755 = vmatpush1.msra.mxu0 0.0
  %756 = vmatprep.subr.mxu0 0.0
  %757 = vmatpush1.msra.mxu0 0.0
  %758 = vmatprep.subr.mxu0 0.0
  %759 = vmatpush1.msra.mxu0 0.0
  %760 = vmatprep.subr.mxu0 0.0
  %761 = vmatpush1.msra.mxu0 0.0
  %762 = vmatprep.mubr.f32.mxu0 0.0
  %763 = vmatmul.mubr.f32.gmra.mrb[0].mxu0 %v651
  %v764 = vpop.f32.mrb[0].mxu0
  %v765 = vadd.f32 0.0, %v764
  %v766 = vpop.f32.mrb[0].mxu0
  %767 = vmatprep.mubr.f32.mxu0 0.0
  %768 = vmatmul.mubr.f32.gmra.mrb[0].mxu0 %v654
  %v769 = vpop.f32.mrb[0].mxu0
  %v770 = vadd.f32 0.0, %v769
  %v771 = vpop.f32.mrb[0].mxu0
  %772 = vmatprep.mubr.f32.mxu0 0.0
  %773 = vmatmul.mubr.f32.gmra.mrb[0].mxu0 %v657
  %v774 = vpop.f32.mrb[0].mxu0
  %v775 = vadd.f32 0.0, %v774
  %v776 = vpop.f32.mrb[0].mxu0
  %777 = vmatprep.mubr.f32.mxu0 0.0
  %778 = vmatmul.mubr.f32.gmra.mrb[0].mxu0 %v660
  %v779 = vpop.f32.mrb[0].mxu0
  %v780 = vadd.f32 0.0, %v779
  %v781 = vpop.f32.mrb[0].mxu0
  %782 = vmatprep.mubr.f32.mxu0 0.0
  %783 = vmatmul.mubr.f32.gmra.mrb[0].mxu0 %v663
  %v784 = vpop.f32.mrb[0].mxu0
  %v785 = vadd.f32 0.0, %v784
  %v786 = vpop.f32.mrb[0].mxu0
  %787 = vmatprep.mubr.f32.mxu0 0.0
  %788 = vmatmul.mubr.f32.gmra.mrb[0].mxu0 %v666
  %v789 = vpop.f32.mrb[0].mxu0
  %v790 = vadd.f32 0.0, %v789
  %v791 = vpop.f32.mrb[0].mxu0
  %792 = vmatprep.mubr.f32.mxu0 0.0
  %793 = vmatmul.mubr.f32.gmra.mrb[0].mxu0 %v669
  %v794 = vpop.f32.mrb[0].mxu0
  %v795 = vadd.f32 0.0, %v794
  %v796 = vpop.f32.mrb[0].mxu0
  %797 = vmatprep.mubr.f32.mxu0 0.0
  %798 = vmatmul.mubr.f32.gmra.mrb[0].mxu0 %v672
  %v799 = vpop.f32.mrb[0].mxu0
  %v800 = vadd.f32 0.0, %v799
  %v801 = vpop.f32.mrb[0].mxu0
  %802 = vmatprep.mubr.f32.mxu0 0.0
  %803 = vmatmul.mubr.f32.gmra.mrb[0].mxu0 %v675
  %v804 = vpop.f32.mrb[0].mxu0
  %v805 = vadd.f32 0.0, %v804
  %v806 = vpop.f32.mrb[0].mxu0
  %807 = vmatprep.mubr.f32.mxu0 0.0
  %808 = vmatmul.mubr.f32.gmra.mrb[0].mxu0 %v678
  %v809 = vpop.f32.mrb[0].mxu0
  %v810 = vadd.f32 0.0, %v809
  %v811 = vpop.f32.mrb[0].mxu0
  %812 = vmatprep.mubr.f32.mxu0 0.0
  %813 = vmatmul.mubr.f32.gmra.mrb[0].mxu0 %v681
  %v814 = vpop.f32.mrb[0].mxu0
  %v815 = vadd.f32 0.0, %v814
  %v816 = vpop.f32.mrb[0].mxu0
  %817 = vmatprep.mubr.f32.mxu0 0.0
  %818 = vmatmul.mubr.f32.gmra.mrb[0].mxu0 %v684
  %v819 = vpop.f32.mrb[0].mxu0
  %v820 = vadd.f32 0.0, %v819
  %v821 = vpop.f32.mrb[0].mxu0
  %822 = vmatprep.mubr.f32.mxu0 0.0
  %823 = vmatmul.mubr.f32.gmra.mrb[0].mxu0 %v687
  %v824 = vpop.f32.mrb[0].mxu0
  %v825 = vadd.f32 0.0, %v824
  %v826 = vpop.f32.mrb[0].mxu0
  %827 = vmatprep.mubr.f32.mxu0 0.0
  %828 = vmatmul.mubr.f32.gmra.mrb[0].mxu0 %v690
  %v829 = vpop.f32.mrb[0].mxu0
  %v830 = vadd.f32 0.0, %v829
  %v831 = vpop.f32.mrb[0].mxu0
  %832 = vmatprep.mubr.f32.mxu0 0.0
  %833 = vmatmul.mubr.f32.gmra.mrb[0].mxu0 %v693
  %v834 = vpop.f32.mrb[0].mxu0
  %v835 = vadd.f32 0.0, %v834
  %v836 = vpop.f32.mrb[0].mxu0
  %837 = vmatprep.mubr.f32.mxu0 0.0
  %838 = vmatmul.mubr.f32.gmra.mrb[0].mxu0 %v696
  %v839 = vpop.f32.mrb[0].mxu0
  %v840 = vadd.f32 0.0, %v839
  %v841 = vpop.f32.mrb[0].mxu0
  %842 = vdwg.mxu0
  %843 = vmatprep.subr.mxu0 0.0
  %844 = vmatpush1.msra.mxu0 %v765
  %845 = vmatprep.subr.mxu0 0.0
  %846 = vmatpush1.msra.mxu0 %v770
  %847 = vmatprep.subr.mxu0 0.0
  %848 = vmatpush1.msra.mxu0 %v775
  %849 = vmatprep.subr.mxu0 0.0
  %850 = vmatpush1.msra.mxu0 %v780
  %851 = vmatprep.subr.mxu0 0.0
  %852 = vmatpush1.msra.mxu0 %v785
  %853 = vmatprep.subr.mxu0 0.0
  %854 = vmatpush1.msra.mxu0 %v790
  %855 = vmatprep.subr.mxu0 0.0
  %856 = vmatpush1.msra.mxu0 %v795
  %857 = vmatprep.subr.mxu0 0.0
  %858 = vmatpush1.msra.mxu0 %v800
  %859 = vmatprep.subr.mxu0 0.0
  %860 = vmatpush1.msra.mxu0 %v805
  %861 = vmatprep.subr.mxu0 0.0
  %862 = vmatpush1.msra.mxu0 %v810
  %863 = vmatprep.subr.mxu0 0.0
  %864 = vmatpush1.msra.mxu0 %v815
  %865 = vmatprep.subr.mxu0 0.0
  %866 = vmatpush1.msra.mxu0 %v820
  %867 = vmatprep.subr.mxu0 0.0
  %868 = vmatpush1.msra.mxu0 %v825
  %869 = vmatprep.subr.mxu0 0.0
  %870 = vmatpush1.msra.mxu0 %v830
  %871 = vmatprep.subr.mxu0 0.0
  %872 = vmatpush1.msra.mxu0 %v835
  %873 = vmatprep.subr.mxu0 0.0
  %874 = vmatpush1.msra.mxu0 %v840
  %875 = vmatprep.subr.mxu0 0.0
  %876 = vmatpush1.msra.mxu0 0.0
  %877 = vmatprep.subr.mxu0 0.0
  %878 = vmatpush1.msra.mxu0 0.0
  %879 = vmatprep.subr.mxu0 0.0
  %880 = vmatpush1.msra.mxu0 0.0
  %881 = vmatprep.subr.mxu0 0.0
  %882 = vmatpush1.msra.mxu0 0.0
  %883 = vmatprep.subr.mxu0 0.0
  %884 = vmatpush1.msra.mxu0 0.0
  %885 = vmatprep.subr.mxu0 0.0
  %886 = vmatpush1.msra.mxu0 0.0
  %887 = vmatprep.subr.mxu0 0.0
  %888 = vmatpush1.msra.mxu0 0.0
  %889 = vmatprep.subr.mxu0 0.0
  %890 = vmatpush1.msra.mxu0 0.0
  %891 = vmatprep.subr.mxu0 0.0
  %892 = vmatpush1.msra.mxu0 0.0
  %893 = vmatprep.subr.mxu0 0.0
  %894 = vmatpush1.msra.mxu0 0.0
  %895 = vmatprep.subr.mxu0 0.0
  %896 = vmatpush1.msra.mxu0 0.0
  %897 = vmatprep.subr.mxu0 0.0
  %898 = vmatpush1.msra.mxu0 0.0
  %899 = vmatprep.subr.mxu0 0.0
  %900 = vmatpush1.msra.mxu0 0.0
  %901 = vmatprep.subr.mxu0 0.0
  %902 = vmatpush1.msra.mxu0 0.0
  %903 = vmatprep.subr.mxu0 0.0
  %904 = vmatpush1.msra.mxu0 0.0
  %905 = vmatprep.subr.mxu0 0.0
  %906 = vmatpush1.msra.mxu0 0.0
  %907 = vmatprep.mubr.f32.mxu0 0.0
  %908 = vmatmul.mubr.f32.gmra.mrb[0].mxu0 %v19
  %v909 = vpop.f32.mrb[0].mxu0
  %v910 = vadd.f32 0.0, %v909
  %v911 = vpop.f32.mrb[0].mxu0
  %912 = vmatprep.mubr.f32.mxu0 0.0
  %913 = vmatmul.mubr.f32.gmra.mrb[0].mxu0 %v20
  %v914 = vpop.f32.mrb[0].mxu0
  %v915 = vadd.f32 0.0, %v914
  %v916 = vpop.f32.mrb[0].mxu0
  %917 = vmatprep.mubr.f32.mxu0 0.0
  %918 = vmatmul.mubr.f32.gmra.mrb[0].mxu0 %v21
  %v919 = vpop.f32.mrb[0].mxu0
  %v920 = vadd.f32 0.0, %v919
  %v921 = vpop.f32.mrb[0].mxu0
  %922 = vmatprep.mubr.f32.mxu0 0.0
  %923 = vmatmul.mubr.f32.gmra.mrb[0].mxu0 %v22
  %v924 = vpop.f32.mrb[0].mxu0
  %v925 = vadd.f32 0.0, %v924
  %v926 = vpop.f32.mrb[0].mxu0
  %927 = vmatprep.mubr.f32.mxu0 0.0
  %928 = vmatmul.mubr.f32.gmra.mrb[0].mxu0 %v23
  %v929 = vpop.f32.mrb[0].mxu0
  %v930 = vadd.f32 0.0, %v929
  %v931 = vpop.f32.mrb[0].mxu0
  %932 = vmatprep.mubr.f32.mxu0 0.0
  %933 = vmatmul.mubr.f32.gmra.mrb[0].mxu0 %v24
  %v934 = vpop.f32.mrb[0].mxu0
  %v935 = vadd.f32 0.0, %v934
  %v936 = vpop.f32.mrb[0].mxu0
  %937 = vdwg.mxu0
  %v938 = vmul.f32 %v41, %v41
  %v939 = vmul.f32 %v42, %v42
  %v940 = vmul.f32 %v43, %v43
  %v941 = vmul.f32 %v44, %v44
  %v942 = vmul.f32 %v45, %v45
  %v943 = vmul.f32 %v46, %v46
  %v944 = vmul.f32 %v47, %v47
  %v945 = vmul.f32 %v48, %v48
  %v946 = vmul.f32 %v49, %v49
  %v947 = vmul.f32 %v50, %v50
  %v948 = vmul.f32 %v51, %v51
  %v949 = vmul.f32 %v52, %v52
  %v950 = vmul.f32 %v53, %v53
  %v951 = vmul.f32 %v54, %v54
  %v952 = vmul.f32 %v55, %v55
  %v953 = vmul.f32 %v56, %v56
  %v955 = vsel %vm57, %v938, 0
  %v958 = vsel %vm57, %v939, 0
  %v961 = vsel %vm57, %v940, 0
  %v964 = vsel %vm57, %v941, 0
  %v967 = vsel %vm57, %v942, 0
  %v970 = vsel %vm57, %v943, 0
  %v973 = vsel %vm57, %v944, 0
  %v976 = vsel %vm57, %v945, 0
  %v979 = vsel %vm57, %v946, 0
  %v982 = vsel %vm57, %v947, 0
  %v985 = vsel %vm57, %v948, 0
  %v988 = vsel %vm57, %v949, 0
  %v991 = vsel %vm57, %v950, 0
  %v994 = vsel %vm57, %v951, 0
  %v997 = vsel %vm57, %v952, 0
  %v1000 = vsel %vm57, %v953, 0
  %1002 = vmatprep.subr.mxu0 0.0
  %1003 = vmatpush1.msra.mxu0 %v17
  %1004 = vmatprep.subr.mxu0 0.0
  %1005 = vmatpush1.msra.mxu0 %v18
  %1006 = vmatprep.subr.mxu0 0.0
  %1007 = vmatpush1.msra.mxu0 0.0
  %1008 = vmatprep.subr.mxu0 0.0
  %1009 = vmatpush1.msra.mxu0 0.0
  %1010 = vmatprep.subr.mxu0 0.0
  %1011 = vmatpush1.msra.mxu0 0.0
  %1012 = vmatprep.subr.mxu0 0.0
  %1013 = vmatpush1.msra.mxu0 0.0
  %1014 = vmatprep.subr.mxu0 0.0
  %1015 = vmatpush1.msra.mxu0 0.0
  %1016 = vmatprep.subr.mxu0 0.0
  %1017 = vmatpush1.msra.mxu0 0.0
  %1018 = vmatprep.subr.mxu0 0.0
  %1019 = vmatpush1.msra.mxu0 0.0
  %1020 = vmatprep.subr.mxu0 0.0
  %1021 = vmatpush1.msra.mxu0 0.0
  %1022 = vmatprep.subr.mxu0 0.0
  %1023 = vmatpush1.msra.mxu0 0.0
  %1024 = vmatprep.subr.mxu0 0.0
  %1025 = vmatpush1.msra.mxu0 0.0
  %1026 = vmatprep.subr.mxu0 0.0
  %1027 = vmatpush1.msra.mxu0 0.0
  %1028 = vmatprep.subr.mxu0 0.0
  %1029 = vmatpush1.msra.mxu0 0.0
  %1030 = vmatprep.subr.mxu0 0.0
  %1031 = vmatpush1.msra.mxu0 0.0
  %1032 = vmatprep.subr.mxu0 0.0
  %1033 = vmatpush1.msra.mxu0 0.0
  %1034 = vmatprep.subr.mxu0 0.0
  %1035 = vmatpush1.msra.mxu0 0.0
  %1036 = vmatprep.subr.mxu0 0.0
  %1037 = vmatpush1.msra.mxu0 0.0
  %1038 = vmatprep.subr.mxu0 0.0
  %1039 = vmatpush1.msra.mxu0 0.0
  %1040 = vmatprep.subr.mxu0 0.0
  %1041 = vmatpush1.msra.mxu0 0.0
  %1042 = vmatprep.subr.mxu0 0.0
  %1043 = vmatpush1.msra.mxu0 0.0
  %1044 = vmatprep.subr.mxu0 0.0
  %1045 = vmatpush1.msra.mxu0 0.0
  %1046 = vmatprep.subr.mxu0 0.0
  %1047 = vmatpush1.msra.mxu0 0.0
  %1048 = vmatprep.subr.mxu0 0.0
  %1049 = vmatpush1.msra.mxu0 0.0
  %1050 = vmatprep.subr.mxu0 0.0
  %1051 = vmatpush1.msra.mxu0 0.0
  %1052 = vmatprep.subr.mxu0 0.0
  %1053 = vmatpush1.msra.mxu0 0.0
  %1054 = vmatprep.subr.mxu0 0.0
  %1055 = vmatpush1.msra.mxu0 0.0
  %1056 = vmatprep.subr.mxu0 0.0
  %1057 = vmatpush1.msra.mxu0 0.0
  %1058 = vmatprep.subr.mxu0 0.0
  %1059 = vmatpush1.msra.mxu0 0.0
  %1060 = vmatprep.subr.mxu0 0.0
  %1061 = vmatpush1.msra.mxu0 0.0
  %1062 = vmatprep.subr.mxu0 0.0
  %1063 = vmatpush1.msra.mxu0 0.0
  %1064 = vmatprep.subr.mxu0 0.0
  %1065 = vmatpush1.msra.mxu0 0.0
  %1066 = vmatprep.mubr.f32.mxu0 0.0
  %1067 = vmatmul.mubr.f32.gmra.mrb[0].mxu0 %v955
  %v1068 = vpop.f32.mrb[0].mxu0
  %v1069 = vadd.f32 0.0, %v1068
  %v1070 = vpop.f32.mrb[0].mxu0
  %1071 = vmatprep.mubr.f32.mxu0 0.0
  %1072 = vmatmul.mubr.f32.gmra.mrb[0].mxu0 %v958
  %v1073 = vpop.f32.mrb[0].mxu0
  %v1074 = vadd.f32 0.0, %v1073
  %v1075 = vpop.f32.mrb[0].mxu0
  %1076 = vmatprep.mubr.f32.mxu0 0.0
  %1077 = vmatmul.mubr.f32.gmra.mrb[0].mxu0 %v961
  %v1078 = vpop.f32.mrb[0].mxu0
  %v1079 = vadd.f32 0.0, %v1078
  %v1080 = vpop.f32.mrb[0].mxu0
  %1081 = vmatprep.mubr.f32.mxu0 0.0
  %1082 = vmatmul.mubr.f32.gmra.mrb[0].mxu0 %v964
  %v1083 = vpop.f32.mrb[0].mxu0
  %v1084 = vadd.f32 0.0, %v1083
  %v1085 = vpop.f32.mrb[0].mxu0
  %1086 = vmatprep.mubr.f32.mxu0 0.0
  %1087 = vmatmul.mubr.f32.gmra.mrb[0].mxu0 %v967
  %v1088 = vpop.f32.mrb[0].mxu0
  %v1089 = vadd.f32 0.0, %v1088
  %v1090 = vpop.f32.mrb[0].mxu0
  %1091 = vmatprep.mubr.f32.mxu0 0.0
  %1092 = vmatmul.mubr.f32.gmra.mrb[0].mxu0 %v970
  %v1093 = vpop.f32.mrb[0].mxu0
  %v1094 = vadd.f32 0.0, %v1093
  %v1095 = vpop.f32.mrb[0].mxu0
  %1096 = vmatprep.mubr.f32.mxu0 0.0
  %1097 = vmatmul.mubr.f32.gmra.mrb[0].mxu0 %v973
  %v1098 = vpop.f32.mrb[0].mxu0
  %v1099 = vadd.f32 0.0, %v1098
  %v1100 = vpop.f32.mrb[0].mxu0
  %1101 = vmatprep.mubr.f32.mxu0 0.0
  %1102 = vmatmul.mubr.f32.gmra.mrb[0].mxu0 %v976
  %v1103 = vpop.f32.mrb[0].mxu0
  %v1104 = vadd.f32 0.0, %v1103
  %v1105 = vpop.f32.mrb[0].mxu0
  %1106 = vmatprep.mubr.f32.mxu0 0.0
  %1107 = vmatmul.mubr.f32.gmra.mrb[0].mxu0 %v979
  %v1108 = vpop.f32.mrb[0].mxu0
  %v1109 = vadd.f32 0.0, %v1108
  %v1110 = vpop.f32.mrb[0].mxu0
  %1111 = vmatprep.mubr.f32.mxu0 0.0
  %1112 = vmatmul.mubr.f32.gmra.mrb[0].mxu0 %v982
  %v1113 = vpop.f32.mrb[0].mxu0
  %v1114 = vadd.f32 0.0, %v1113
  %v1115 = vpop.f32.mrb[0].mxu0
  %1116 = vmatprep.mubr.f32.mxu0 0.0
  %1117 = vmatmul.mubr.f32.gmra.mrb[0].mxu0 %v985
  %v1118 = vpop.f32.mrb[0].mxu0
  %v1119 = vadd.f32 0.0, %v1118
  %v1120 = vpop.f32.mrb[0].mxu0
  %1121 = vmatprep.mubr.f32.mxu0 0.0
  %1122 = vmatmul.mubr.f32.gmra.mrb[0].mxu0 %v988
  %v1123 = vpop.f32.mrb[0].mxu0
  %v1124 = vadd.f32 0.0, %v1123
  %v1125 = vpop.f32.mrb[0].mxu0
  %1126 = vmatprep.mubr.f32.mxu0 0.0
  %1127 = vmatmul.mubr.f32.gmra.mrb[0].mxu0 %v991
  %v1128 = vpop.f32.mrb[0].mxu0
  %v1129 = vadd.f32 0.0, %v1128
  %v1130 = vpop.f32.mrb[0].mxu0
  %1131 = vmatprep.mubr.f32.mxu0 0.0
  %1132 = vmatmul.mubr.f32.gmra.mrb[0].mxu0 %v994
  %v1133 = vpop.f32.mrb[0].mxu0
  %v1134 = vadd.f32 0.0, %v1133
  %v1135 = vpop.f32.mrb[0].mxu0
  %1136 = vmatprep.mubr.f32.mxu0 0.0
  %1137 = vmatmul.mubr.f32.gmra.mrb[0].mxu0 %v997
  %v1138 = vpop.f32.mrb[0].mxu0
  %v1139 = vadd.f32 0.0, %v1138
  %v1140 = vpop.f32.mrb[0].mxu0
  %1141 = vmatprep.mubr.f32.mxu0 0.0
  %1142 = vmatmul.mubr.f32.gmra.mrb[0].mxu0 %v1000
  %v1143 = vpop.f32.mrb[0].mxu0
  %v1144 = vadd.f32 0.0, %v1143
  %v1145 = vpop.f32.mrb[0].mxu0
  %1146 = vdwg.mxu0
  %1147 = vmatprep.subr.mxu0 0.0
  %1148 = vmatpush1.msra.mxu0 %v1069
  %1149 = vmatprep.subr.mxu0 0.0
  %1150 = vmatpush1.msra.mxu0 %v1074
  %1151 = vmatprep.subr.mxu0 0.0
  %1152 = vmatpush1.msra.mxu0 %v1079
  %1153 = vmatprep.subr.mxu0 0.0
  %1154 = vmatpush1.msra.mxu0 %v1084
  %1155 = vmatprep.subr.mxu0 0.0
  %1156 = vmatpush1.msra.mxu0 %v1089
  %1157 = vmatprep.subr.mxu0 0.0
  %1158 = vmatpush1.msra.mxu0 %v1094
  %1159 = vmatprep.subr.mxu0 0.0
  %1160 = vmatpush1.msra.mxu0 %v1099
  %1161 = vmatprep.subr.mxu0 0.0
  %1162 = vmatpush1.msra.mxu0 %v1104
  %1163 = vmatprep.subr.mxu0 0.0
  %1164 = vmatpush1.msra.mxu0 %v1109
  %1165 = vmatprep.subr.mxu0 0.0
  %1166 = vmatpush1.msra.mxu0 %v1114
  %1167 = vmatprep.subr.mxu0 0.0
  %1168 = vmatpush1.msra.mxu0 %v1119
  %1169 = vmatprep.subr.mxu0 0.0
  %1170 = vmatpush1.msra.mxu0 %v1124
  %1171 = vmatprep.subr.mxu0 0.0
  %1172 = vmatpush1.msra.mxu0 %v1129
  %1173 = vmatprep.subr.mxu0 0.0
  %1174 = vmatpush1.msra.mxu0 %v1134
  %1175 = vmatprep.subr.mxu0 0.0
  %1176 = vmatpush1.msra.mxu0 %v1139
  %1177 = vmatprep.subr.mxu0 0.0
  %1178 = vmatpush1.msra.mxu0 %v1144
  %1179 = vmatprep.subr.mxu0 0.0
  %1180 = vmatpush1.msra.mxu0 0.0
  %1181 = vmatprep.subr.mxu0 0.0
  %1182 = vmatpush1.msra.mxu0 0.0
  %1183 = vmatprep.subr.mxu0 0.0
  %1184 = vmatpush1.msra.mxu0 0.0
  %1185 = vmatprep.subr.mxu0 0.0
  %1186 = vmatpush1.msra.mxu0 0.0
  %1187 = vmatprep.subr.mxu0 0.0
  %1188 = vmatpush1.msra.mxu0 0.0
  %1189 = vmatprep.subr.mxu0 0.0
  %1190 = vmatpush1.msra.mxu0 0.0
  %1191 = vmatprep.subr.mxu0 0.0
  %1192 = vmatpush1.msra.mxu0 0.0
  %1193 = vmatprep.subr.mxu0 0.0
  %1194 = vmatpush1.msra.mxu0 0.0
  %1195 = vmatprep.subr.mxu0 0.0
  %1196 = vmatpush1.msra.mxu0 0.0
  %1197 = vmatprep.subr.mxu0 0.0
  %1198 = vmatpush1.msra.mxu0 0.0
  %1199 = vmatprep.subr.mxu0 0.0
  %1200 = vmatpush1.msra.mxu0 0.0
  %1201 = vmatprep.subr.mxu0 0.0
  %1202 = vmatpush1.msra.mxu0 0.0
  %1203 = vmatprep.subr.mxu0 0.0
  %1204 = vmatpush1.msra.mxu0 0.0
  %1205 = vmatprep.subr.mxu0 0.0
  %1206 = vmatpush1.msra.mxu0 0.0
  %1207 = vmatprep.subr.mxu0 0.0
  %1208 = vmatpush1.msra.mxu0 0.0
  %1209 = vmatprep.subr.mxu0 0.0
  %1210 = vmatpush1.msra.mxu0 0.0
  %1211 = vmatprep.mubr.f32.mxu0 0.0
  %1212 = vmatmul.mubr.f32.gmra.mrb[0].mxu0 %v19
  %v1213 = vpop.f32.mrb[0].mxu0
  %v1214 = vadd.f32 0.0, %v1213
  %v1215 = vpop.f32.mrb[0].mxu0
  %1216 = vmatprep.mubr.f32.mxu0 0.0
  %1217 = vmatmul.mubr.f32.gmra.mrb[0].mxu0 %v20
  %v1218 = vpop.f32.mrb[0].mxu0
  %v1219 = vadd.f32 0.0, %v1218
  %v1220 = vpop.f32.mrb[0].mxu0
  %1221 = vmatprep.mubr.f32.mxu0 0.0
  %1222 = vmatmul.mubr.f32.gmra.mrb[0].mxu0 %v21
  %v1223 = vpop.f32.mrb[0].mxu0
  %v1224 = vadd.f32 0.0, %v1223
  %v1225 = vpop.f32.mrb[0].mxu0
  %1226 = vmatprep.mubr.f32.mxu0 0.0
  %1227 = vmatmul.mubr.f32.gmra.mrb[0].mxu0 %v22
  %v1228 = vpop.f32.mrb[0].mxu0
  %v1229 = vadd.f32 0.0, %v1228
  %v1230 = vpop.f32.mrb[0].mxu0
  %1231 = vmatprep.mubr.f32.mxu0 0.0
  %1232 = vmatmul.mubr.f32.gmra.mrb[0].mxu0 %v23
  %v1233 = vpop.f32.mrb[0].mxu0
  %v1234 = vadd.f32 0.0, %v1233
  %v1235 = vpop.f32.mrb[0].mxu0
  %1236 = vmatprep.mubr.f32.mxu0 0.0
  %1237 = vmatmul.mubr.f32.gmra.mrb[0].mxu0 %v24
  %v1238 = vpop.f32.mrb[0].mxu0
  %v1239 = vadd.f32 0.0, %v1238
  %v1240 = vpop.f32.mrb[0].mxu0
  %1241 = vdwg.mxu0
  %v1242 = vmul.f32 %v25, %v41
  %v1243 = vmul.f32 %v26, %v42
  %v1244 = vmul.f32 %v27, %v43
  %v1245 = vmul.f32 %v28, %v44
  %v1246 = vmul.f32 %v29, %v45
  %v1247 = vmul.f32 %v30, %v46
  %v1248 = vmul.f32 %v31, %v47
  %v1249 = vmul.f32 %v32, %v48
  %v1250 = vmul.f32 %v33, %v49
  %v1251 = vmul.f32 %v34, %v50
  %v1252 = vmul.f32 %v35, %v51
  %v1253 = vmul.f32 %v36, %v52
  %v1254 = vmul.f32 %v37, %v53
  %v1255 = vmul.f32 %v38, %v54
  %v1256 = vmul.f32 %v39, %v55
  %v1257 = vmul.f32 %v40, %v56
  %v1259 = vsel %vm57, %v1242, 0
  %v1262 = vsel %vm57, %v1243, 0
  %v1265 = vsel %vm57, %v1244, 0
  %v1268 = vsel %vm57, %v1245, 0
  %v1271 = vsel %vm57, %v1246, 0
  %v1274 = vsel %vm57, %v1247, 0
  %v1277 = vsel %vm57, %v1248, 0
  %v1280 = vsel %vm57, %v1249, 0
  %v1283 = vsel %vm57, %v1250, 0
  %v1286 = vsel %vm57, %v1251, 0
  %v1289 = vsel %vm57, %v1252, 0
  %v1292 = vsel %vm57, %v1253, 0
  %v1295 = vsel %vm57, %v1254, 0
  %v1298 = vsel %vm57, %v1255, 0
  %v1301 = vsel %vm57, %v1256, 0
  %v1304 = vsel %vm57, %v1257, 0
  %1306 = vmatprep.subr.mxu0 0.0
  %1307 = vmatpush1.msra.mxu0 %v17
  %1308 = vmatprep.subr.mxu0 0.0
  %1309 = vmatpush1.msra.mxu0 %v18
  %1310 = vmatprep.subr.mxu0 0.0
  %1311 = vmatpush1.msra.mxu0 0.0
  %1312 = vmatprep.subr.mxu0 0.0
  %1313 = vmatpush1.msra.mxu0 0.0
  %1314 = vmatprep.subr.mxu0 0.0
  %1315 = vmatpush1.msra.mxu0 0.0
  %1316 = vmatprep.subr.mxu0 0.0
  %1317 = vmatpush1.msra.mxu0 0.0
  %1318 = vmatprep.subr.mxu0 0.0
  %1319 = vmatpush1.msra.mxu0 0.0
  %1320 = vmatprep.subr.mxu0 0.0
  %1321 = vmatpush1.msra.mxu0 0.0
  %1322 = vmatprep.subr.mxu0 0.0
  %1323 = vmatpush1.msra.mxu0 0.0
  %1324 = vmatprep.subr.mxu0 0.0
  %1325 = vmatpush1.msra.mxu0 0.0
  %1326 = vmatprep.subr.mxu0 0.0
  %1327 = vmatpush1.msra.mxu0 0.0
  %1328 = vmatprep.subr.mxu0 0.0
  %1329 = vmatpush1.msra.mxu0 0.0
  %1330 = vmatprep.subr.mxu0 0.0
  %1331 = vmatpush1.msra.mxu0 0.0
  %1332 = vmatprep.subr.mxu0 0.0
  %1333 = vmatpush1.msra.mxu0 0.0
  %1334 = vmatprep.subr.mxu0 0.0
  %1335 = vmatpush1.msra.mxu0 0.0
  %1336 = vmatprep.subr.mxu0 0.0
  %1337 = vmatpush1.msra.mxu0 0.0
  %1338 = vmatprep.subr.mxu0 0.0
  %1339 = vmatpush1.msra.mxu0 0.0
  %1340 = vmatprep.subr.mxu0 0.0
  %1341 = vmatpush1.msra.mxu0 0.0
  %1342 = vmatprep.subr.mxu0 0.0
  %1343 = vmatpush1.msra.mxu0 0.0
  %1344 = vmatprep.subr.mxu0 0.0
  %1345 = vmatpush1.msra.mxu0 0.0
  %1346 = vmatprep.subr.mxu0 0.0
  %1347 = vmatpush1.msra.mxu0 0.0
  %1348 = vmatprep.subr.mxu0 0.0
  %1349 = vmatpush1.msra.mxu0 0.0
  %1350 = vmatprep.subr.mxu0 0.0
  %1351 = vmatpush1.msra.mxu0 0.0
  %1352 = vmatprep.subr.mxu0 0.0
  %1353 = vmatpush1.msra.mxu0 0.0
  %1354 = vmatprep.subr.mxu0 0.0
  %1355 = vmatpush1.msra.mxu0 0.0
  %1356 = vmatprep.subr.mxu0 0.0
  %1357 = vmatpush1.msra.mxu0 0.0
  %1358 = vmatprep.subr.mxu0 0.0
  %1359 = vmatpush1.msra.mxu0 0.0
  %1360 = vmatprep.subr.mxu0 0.0
  %1361 = vmatpush1.msra.mxu0 0.0
  %1362 = vmatprep.subr.mxu0 0.0
  %1363 = vmatpush1.msra.mxu0 0.0
  %1364 = vmatprep.subr.mxu0 0.0
  %1365 = vmatpush1.msra.mxu0 0.0
  %1366 = vmatprep.subr.mxu0 0.0
  %1367 = vmatpush1.msra.mxu0 0.0
  %1368 = vmatprep.subr.mxu0 0.0
  %1369 = vmatpush1.msra.mxu0 0.0
  %1370 = vmatprep.mubr.f32.mxu0 0.0
  %1371 = vmatmul.mubr.f32.gmra.mrb[0].mxu0 %v1259
  %v1372 = vpop.f32.mrb[0].mxu0
  %v1373 = vadd.f32 0.0, %v1372
  %v1374 = vpop.f32.mrb[0].mxu0
  %1375 = vmatprep.mubr.f32.mxu0 0.0
  %1376 = vmatmul.mubr.f32.gmra.mrb[0].mxu0 %v1262
  %v1377 = vpop.f32.mrb[0].mxu0
  %v1378 = vadd.f32 0.0, %v1377
  %v1379 = vpop.f32.mrb[0].mxu0
  %1380 = vmatprep.mubr.f32.mxu0 0.0
  %1381 = vmatmul.mubr.f32.gmra.mrb[0].mxu0 %v1265
  %v1382 = vpop.f32.mrb[0].mxu0
  %v1383 = vadd.f32 0.0, %v1382
  %v1384 = vpop.f32.mrb[0].mxu0
  %1385 = vmatprep.mubr.f32.mxu0 0.0
  %1386 = vmatmul.mubr.f32.gmra.mrb[0].mxu0 %v1268
  %v1387 = vpop.f32.mrb[0].mxu0
  %v1388 = vadd.f32 0.0, %v1387
  %v1389 = vpop.f32.mrb[0].mxu0
  %1390 = vmatprep.mubr.f32.mxu0 0.0
  %1391 = vmatmul.mubr.f32.gmra.mrb[0].mxu0 %v1271
  %v1392 = vpop.f32.mrb[0].mxu0
  %v1393 = vadd.f32 0.0, %v1392
  %v1394 = vpop.f32.mrb[0].mxu0
  %1395 = vmatprep.mubr.f32.mxu0 0.0
  %1396 = vmatmul.mubr.f32.gmra.mrb[0].mxu0 %v1274
  %v1397 = vpop.f32.mrb[0].mxu0
  %v1398 = vadd.f32 0.0, %v1397
  %v1399 = vpop.f32.mrb[0].mxu0
  %1400 = vmatprep.mubr.f32.mxu0 0.0
  %1401 = vmatmul.mubr.f32.gmra.mrb[0].mxu0 %v1277
  %v1402 = vpop.f32.mrb[0].mxu0
  %v1403 = vadd.f32 0.0, %v1402
  %v1404 = vpop.f32.mrb[0].mxu0
  %1405 = vmatprep.mubr.f32.mxu0 0.0
  %1406 = vmatmul.mubr.f32.gmra.mrb[0].mxu0 %v1280
  %v1407 = vpop.f32.mrb[0].mxu0
  %v1408 = vadd.f32 0.0, %v1407
  %v1409 = vpop.f32.mrb[0].mxu0
  %1410 = vmatprep.mubr.f32.mxu0 0.0
  %1411 = vmatmul.mubr.f32.gmra.mrb[0].mxu0 %v1283
  %v1412 = vpop.f32.mrb[0].mxu0
  %v1413 = vadd.f32 0.0, %v1412
  %v1414 = vpop.f32.mrb[0].mxu0
  %1415 = vmatprep.mubr.f32.mxu0 0.0
  %1416 = vmatmul.mubr.f32.gmra.mrb[0].mxu0 %v1286
  %v1417 = vpop.f32.mrb[0].mxu0
  %v1418 = vadd.f32 0.0, %v1417
  %v1419 = vpop.f32.mrb[0].mxu0
  %1420 = vmatprep.mubr.f32.mxu0 0.0
  %1421 = vmatmul.mubr.f32.gmra.mrb[0].mxu0 %v1289
  %v1422 = vpop.f32.mrb[0].mxu0
  %v1423 = vadd.f32 0.0, %v1422
  %v1424 = vpop.f32.mrb[0].mxu0
  %1425 = vmatprep.mubr.f32.mxu0 0.0
  %1426 = vmatmul.mubr.f32.gmra.mrb[0].mxu0 %v1292
  %v1427 = vpop.f32.mrb[0].mxu0
  %v1428 = vadd.f32 0.0, %v1427
  %v1429 = vpop.f32.mrb[0].mxu0
  %1430 = vmatprep.mubr.f32.mxu0 0.0
  %1431 = vmatmul.mubr.f32.gmra.mrb[0].mxu0 %v1295
  %v1432 = vpop.f32.mrb[0].mxu0
  %v1433 = vadd.f32 0.0, %v1432
  %v1434 = vpop.f32.mrb[0].mxu0
  %1435 = vmatprep.mubr.f32.mxu0 0.0
  %1436 = vmatmul.mubr.f32.gmra.mrb[0].mxu0 %v1298
  %v1437 = vpop.f32.mrb[0].mxu0
  %v1438 = vadd.f32 0.0, %v1437
  %v1439 = vpop.f32.mrb[0].mxu0
  %1440 = vmatprep.mubr.f32.mxu0 0.0
  %1441 = vmatmul.mubr.f32.gmra.mrb[0].mxu0 %v1301
  %v1442 = vpop.f32.mrb[0].mxu0
  %v1443 = vadd.f32 0.0, %v1442
  %v1444 = vpop.f32.mrb[0].mxu0
  %1445 = vmatprep.mubr.f32.mxu0 0.0
  %1446 = vmatmul.mubr.f32.gmra.mrb[0].mxu0 %v1304
  %v1447 = vpop.f32.mrb[0].mxu0
  %v1448 = vadd.f32 0.0, %v1447
  %v1449 = vpop.f32.mrb[0].mxu0
  %1450 = vdwg.mxu0
  %1451 = vmatprep.subr.mxu0 0.0
  %1452 = vmatpush1.msra.mxu0 %v1373
  %1453 = vmatprep.subr.mxu0 0.0
  %1454 = vmatpush1.msra.mxu0 %v1378
  %1455 = vmatprep.subr.mxu0 0.0
  %1456 = vmatpush1.msra.mxu0 %v1383
  %1457 = vmatprep.subr.mxu0 0.0
  %1458 = vmatpush1.msra.mxu0 %v1388
  %1459 = vmatprep.subr.mxu0 0.0
  %1460 = vmatpush1.msra.mxu0 %v1393
  %1461 = vmatprep.subr.mxu0 0.0
  %1462 = vmatpush1.msra.mxu0 %v1398
  %1463 = vmatprep.subr.mxu0 0.0
  %1464 = vmatpush1.msra.mxu0 %v1403
  %1465 = vmatprep.subr.mxu0 0.0
  %1466 = vmatpush1.msra.mxu0 %v1408
  %1467 = vmatprep.subr.mxu0 0.0
  %1468 = vmatpush1.msra.mxu0 %v1413
  %1469 = vmatprep.subr.mxu0 0.0
  %1470 = vmatpush1.msra.mxu0 %v1418
  %1471 = vmatprep.subr.mxu0 0.0
  %1472 = vmatpush1.msra.mxu0 %v1423
  %1473 = vmatprep.subr.mxu0 0.0
  %1474 = vmatpush1.msra.mxu0 %v1428
  %1475 = vmatprep.subr.mxu0 0.0
  %1476 = vmatpush1.msra.mxu0 %v1433
  %1477 = vmatprep.subr.mxu0 0.0
  %1478 = vmatpush1.msra.mxu0 %v1438
  %1479 = vmatprep.subr.mxu0 0.0
  %1480 = vmatpush1.msra.mxu0 %v1443
  %1481 = vmatprep.subr.mxu0 0.0
  %1482 = vmatpush1.msra.mxu0 %v1448
  %1483 = vmatprep.subr.mxu0 0.0
  %1484 = vmatpush1.msra.mxu0 0.0
  %1485 = vmatprep.subr.mxu0 0.0
  %1486 = vmatpush1.msra.mxu0 0.0
  %1487 = vmatprep.subr.mxu0 0.0
  %1488 = vmatpush1.msra.mxu0 0.0
  %1489 = vmatprep.subr.mxu0 0.0
  %1490 = vmatpush1.msra.mxu0 0.0
  %1491 = vmatprep.subr.mxu0 0.0
  %1492 = vmatpush1.msra.mxu0 0.0
  %1493 = vmatprep.subr.mxu0 0.0
  %1494 = vmatpush1.msra.mxu0 0.0
  %1495 = vmatprep.subr.mxu0 0.0
  %1496 = vmatpush1.msra.mxu0 0.0
  %1497 = vmatprep.subr.mxu0 0.0
  %1498 = vmatpush1.msra.mxu0 0.0
  %1499 = vmatprep.subr.mxu0 0.0
  %1500 = vmatpush1.msra.mxu0 0.0
  %1501 = vmatprep.subr.mxu0 0.0
  %1502 = vmatpush1.msra.mxu0 0.0
  %1503 = vmatprep.subr.mxu0 0.0
  %1504 = vmatpush1.msra.mxu0 0.0
  %1505 = vmatprep.subr.mxu0 0.0
  %1506 = vmatpush1.msra.mxu0 0.0
  %1507 = vmatprep.subr.mxu0 0.0
  %1508 = vmatpush1.msra.mxu0 0.0
  %1509 = vmatprep.subr.mxu0 0.0
  %1510 = vmatpush1.msra.mxu0 0.0
  %1511 = vmatprep.subr.mxu0 0.0
  %1512 = vmatpush1.msra.mxu0 0.0
  %1513 = vmatprep.subr.mxu0 0.0
  %1514 = vmatpush1.msra.mxu0 0.0
  %1515 = vmatprep.mubr.f32.mxu0 0.0
  %1516 = vmatmul.mubr.f32.gmra.mrb[0].mxu0 %v19
  %v1517 = vpop.f32.mrb[0].mxu0
  %v1518 = vadd.f32 0.0, %v1517
  %v1519 = vpop.f32.mrb[0].mxu0
  %1520 = vmatprep.mubr.f32.mxu0 0.0
  %1521 = vmatmul.mubr.f32.gmra.mrb[0].mxu0 %v20
  %v1522 = vpop.f32.mrb[0].mxu0
  %v1523 = vadd.f32 0.0, %v1522
  %v1524 = vpop.f32.mrb[0].mxu0
  %1525 = vmatprep.mubr.f32.mxu0 0.0
  %1526 = vmatmul.mubr.f32.gmra.mrb[0].mxu0 %v21
  %v1527 = vpop.f32.mrb[0].mxu0
  %v1528 = vadd.f32 0.0, %v1527
  %v1529 = vpop.f32.mrb[0].mxu0
  %1530 = vmatprep.mubr.f32.mxu0 0.0
  %1531 = vmatmul.mubr.f32.gmra.mrb[0].mxu0 %v22
  %v1532 = vpop.f32.mrb[0].mxu0
  %v1533 = vadd.f32 0.0, %v1532
  %v1534 = vpop.f32.mrb[0].mxu0
  %1535 = vmatprep.mubr.f32.mxu0 0.0
  %1536 = vmatmul.mubr.f32.gmra.mrb[0].mxu0 %v23
  %v1537 = vpop.f32.mrb[0].mxu0
  %v1538 = vadd.f32 0.0, %v1537
  %v1539 = vpop.f32.mrb[0].mxu0
  %1540 = vmatprep.mubr.f32.mxu0 0.0
  %1541 = vmatmul.mubr.f32.gmra.mrb[0].mxu0 %v24
  %v1542 = vpop.f32.mrb[0].mxu0
  %v1543 = vadd.f32 0.0, %v1542
  %v1544 = vpop.f32.mrb[0].mxu0
  %1545 = vdwg.mxu0
  %v1546 = vmul.f32 %v318, %v318
  %v1547 = vmul.f32 %v323, %v323
  %v1548 = vmul.f32 %v328, %v328
  %v1549 = vmul.f32 %v333, %v333
  %v1550 = vmul.f32 %v338, %v338
  %v1551 = vmul.f32 %v343, %v343
  %v1552 = vmul.f32 %v606, %v606
  %v1553 = vmul.f32 %v611, %v611
  %v1554 = vmul.f32 %v616, %v616
  %v1555 = vmul.f32 %v621, %v621
  %v1556 = vmul.f32 %v626, %v626
  %v1557 = vmul.f32 %v631, %v631
  %v1558 = vmul.f32 %v318, %v606
  %v1559 = vmul.f32 %v323, %v611
  %v1560 = vmul.f32 %v328, %v616
  %v1561 = vmul.f32 %v333, %v621
  %v1562 = vmul.f32 %v338, %v626
  %v1563 = vmul.f32 %v343, %v631
  %v1564 = vsub.f32 %v910, %v1546
  %v1565 = vsub.f32 %v915, %v1547
  %v1566 = vsub.f32 %v920, %v1548
  %v1567 = vsub.f32 %v925, %v1549
  %v1568 = vsub.f32 %v930, %v1550
  %v1569 = vsub.f32 %v935, %v1551
  %v1570 = vsub.f32 %v1214, %v1552
  %v1571 = vsub.f32 %v1219, %v1553
  %v1572 = vsub.f32 %v1224, %v1554
  %v1573 = vsub.f32 %v1229, %v1555
  %v1574 = vsub.f32 %v1234, %v1556
  %v1575 = vsub.f32 %v1239, %v1557
  %v1576 = vsub.f32 %v1518, %v1558
  %v1577 = vsub.f32 %v1523, %v1559
  %v1578 = vsub.f32 %v1528, %v1560
  %v1579 = vsub.f32 %v1533, %v1561
  %v1580 = vsub.f32 %v1538, %v1562
  %v1581 = vsub.f32 %v1543, %v1563
  %v1582 = vmul.f32 %v1558, 2.0
  %v1583 = vmul.f32 %v1559, 2.0
  %v1584 = vmul.f32 %v1560, 2.0
  %v1585 = vmul.f32 %v1561, 2.0
  %v1586 = vmul.f32 %v1562, 2.0
  %v1587 = vmul.f32 %v1563, 2.0
  %v1588 = vadd.f32 %v1582, 0.0001
  %v1589 = vadd.f32 %v1583, 0.0001
  %v1590 = vadd.f32 %v1584, 0.0001
  %v1591 = vadd.f32 %v1585, 0.0001
  %v1592 = vadd.f32 %v1586, 0.0001
  %v1593 = vadd.f32 %v1587, 0.0001
  %v1594 = vmul.f32 %v1576, 2.0
  %v1595 = vmul.f32 %v1577, 2.0
  %v1596 = vmul.f32 %v1578, 2.0
  %v1597 = vmul.f32 %v1579, 2.0
  %v1598 = vmul.f32 %v1580, 2.0
  %v1599 = vmul.f32 %v1581, 2.0
  %v1600 = vadd.f32 %v1594, 0.0009
  %v1601 = vadd.f32 %v1595, 0.0009
  %v1602 = vadd.f32 %v1596, 0.0009
  %v1603 = vadd.f32 %v1597, 0.0009
  %v1604 = vadd.f32 %v1598, 0.0009
  %v1605 = vadd.f32 %v1599, 0.0009
  %v1606 = vmul.f32 %v1588, %v1600
  %v1607 = vmul.f32 %v1589, %v1601
  %v1608 = vmul.f32 %v1590, %v1602
  %v1609 = vmul.f32 %v1591, %v1603
  %v1610 = vmul.f32 %v1592, %v1604
  %v1611 = vmul.f32 %v1593, %v1605
  %v1612 = vadd.f32 %v1546, %v1552
  %v1613 = vadd.f32 %v1547, %v1553
  %v1614 = vadd.f32 %v1548, %v1554
  %v1615 = vadd.f32 %v1549, %v1555
  %v1616 = vadd.f32 %v1550, %v1556
  %v1617 = vadd.f32 %v1551, %v1557
  %v1618 = vadd.f32 %v1612, 0.0001
  %v1619 = vadd.f32 %v1613, 0.0001
  %v1620 = vadd.f32 %v1614, 0.0001
  %v1621 = vadd.f32 %v1615, 0.0001
  %v1622 = vadd.f32 %v1616, 0.0001
  %v1623 = vadd.f32 %v1617, 0.0001
  %v1624 = vadd.f32 %v1564, %v1570
  %v1625 = vadd.f32 %v1565, %v1571
  %v1626 = vadd.f32 %v1566, %v1572
  %v1627 = vadd.f32 %v1567, %v1573
  %v1628 = vadd.f32 %v1568, %v1574
  %v1629 = vadd.f32 %v1569, %v1575
  %v1630 = vadd.f32 %v1624, 0.0009
  %v1631 = vadd.f32 %v1625, 0.0009
  %v1632 = vadd.f32 %v1626, 0.0009
  %v1633 = vadd.f32 %v1627, 0.0009
  %v1634 = vadd.f32 %v1628, 0.0009
  %v1635 = vadd.f32 %v1629, 0.0009
  %v1636 = vmul.f32 %v1618, %v1630
  %v1637 = vmul.f32 %v1619, %v1631
  %v1638 = vmul.f32 %v1620, %v1632
  %v1639 = vmul.f32 %v1621, %v1633
  %v1640 = vmul.f32 %v1622, %v1634
  %v1641 = vmul.f32 %v1623, %v1635
  %v1642 = vrcp.pop %v1636
  %v1643 = vmul.f32 %v1606, %v1642
  %v1644 = vrcp.pop %v1637
  %v1645 = vmul.f32 %v1607, %v1644
  %v1646 = vrcp.pop %v1638
  %v1647 = vmul.f32 %v1608, %v1646
  %v1648 = vrcp.pop %v1639
  %v1649 = vmul.f32 %v1609, %v1648
  %v1650 = vrcp.pop %v1640
  %v1651 = vmul.f32 %v1610, %v1650
  %v1652 = vrcp.pop %v1641
  %v1653 = vmul.f32 %v1611, %v1652
  %vm1654 = vcmask 48128
  %v1655 = vsel %vm1654, %v1643, 0.0
  %1656 = vadd.xlane.f32.xlu0 %v1655
  %v1657 = vpop.xlane.xlu0 %1656
  %v1658 = vsel %vm1654, %v1645, 0.0
  %1659 = vadd.xlane.f32.xlu0 %v1658
  %v1660 = vpop.xlane.xlu0 %1659
  %v1661 = vsel %vm1654, %v1647, 0.0
  %1662 = vadd.xlane.f32.xlu0 %v1661
  %v1663 = vpop.xlane.xlu0 %1662
  %v1664 = vsel %vm1654, %v1649, 0.0
  %1665 = vadd.xlane.f32.xlu0 %v1664
  %v1666 = vpop.xlane.xlu0 %1665
  %v1667 = vsel %vm1654, %v1651, 0.0
  %1668 = vadd.xlane.f32.xlu0 %v1667
  %v1669 = vpop.xlane.xlu0 %1668
  %v1670 = vsel %vm1654, %v1653, 0.0
  %1671 = vadd.xlane.f32.xlu0 %v1670
  %v1672 = vpop.xlane.xlu0 %1671
  %vm1673 = vcmask 7168
  %1674 = vst.msk [vmem:[%s4] sm:$0xff] %vm1673, %v1657
  %1675 = vst.msk [vmem:[%s4 + $0x8] sm:$0xff] %vm1673, %v1660
  %1676 = vst.msk [vmem:[%s4 + $0x10] sm:$0xff] %vm1673, %v1663
  %1677 = vst.msk [vmem:[%s4 + $0x18] sm:$0xff] %vm1673, %v1666
  %1678 = vst.msk [vmem:[%s4 + $0x20] sm:$0xff] %vm1673, %v1669
  %1679 = vst.msk [vmem:[%s4 + $0x28] sm:$0xff] %vm1673, %v1672
  // Predicated region
  $region18: #{tpu_custom_call.1} parent=0 // pred_check
    _
  $region19: #{tpu_custom_call.1} parent=0 // pred_check_branch
    %1681 = sbr.rel (0) target = $region21
  $region20: #{tpu_custom_call.1} parent=0 // pred_region
    _
  $region21: #{tpu_custom_call.1} parent=0 // pred_fallthru
    _
  // Predicated region
  $region22: #{tpu_custom_call.1} parent=0 // pred_check
    _
  $region23: #{tpu_custom_call.1} parent=0 // pred_check_branch
    %1683 = sbr.rel (0) target = $region25
  $region24: #{tpu_custom_call.1} parent=0 // pred_region
    _
  $region25: #{tpu_custom_call.1} parent=0 // pred_fallthru
    _

</llo_original>
